<compile_context>
chip_gen: v7x
topology: tpu7x:2x2x1
jax: 0.10.0
libtpu: 0.0.40
codegen_flags: <defaults>
</compile_context>

<pallas_src>
import functools

import jax
import jax.numpy as jnp
from jax import lax
from jax.experimental import pallas as pl
from jax.experimental.pallas import tpu as pltpu


_INV_SQRT2 = 0.7071067811865476
_SQRT_2_OVER_PI = 0.7978845608028654


def _gelu_f32(x, approximate):
    # approximate=False matches torch.nn.functional.gelu default (erf formulation).
    if approximate:
        # tanh variant: transcendental goes to the EUP slot (useful on VALU-bound v5e).
        return 0.5 * x * (1.0 + jnp.tanh(_SQRT_2_OVER_PI * (x + 0.044715 * x * x * x)))
    return 0.5 * x * (1.0 + lax.erf(x * _INV_SQRT2))


def _resident_kernel(x_ref, w1_ref, b1_ref, w2_ref, b2_ref, o_ref, *, approximate_gelu):
    # Stage 1: Linear(D_in -> D_mid) + GELU, f32 accumulation on the MXU.
    h = jnp.dot(x_ref[...], w1_ref[...], preferred_element_type=jnp.float32)
    h = _gelu_f32(h + b1_ref[...].astype(jnp.float32), approximate_gelu)
    # bf16 operands: run stage 2 at full MXU rate / half vreg pressure (no-op for f32).
    h = h.astype(w2_ref.dtype)
    # Stage 2: Linear(D_mid -> D_out_padded) + GELU.
    y = jnp.dot(h, w2_ref[...], preferred_element_type=jnp.float32)
    y = _gelu_f32(y + b2_ref[...].astype(jnp.float32), approximate_gelu)
    o_ref[...] = y.astype(o_ref.dtype)


def _tiled_kernel(x_ref, w1_ref, b1_ref, w2_ref, b2_ref, o_ref, h_ref, *, approximate_gelu):
    # Grid = (batch tile i ["parallel"], output tile j ["arbitrary", innermost]).
    # Stage 1 runs once per batch tile (at j == 0); its result persists in the
    # h_ref VMEM scratch and is reused for every output tile of that batch tile.
    @pl.when(pl.program_id(1) == 0)
    def _():
        h = jnp.dot(x_ref[...], w1_ref[...], preferred_element_type=jnp.float32)
        h = _gelu_f32(h + b1_ref[...].astype(jnp.float32), approximate_gelu)
        h_ref[...] = h.astype(h_ref.dtype)

    y = jnp.dot(h_ref[...], w2_ref[...], preferred_element_type=jnp.float32)
    y = _gelu_f32(y + b2_ref[...].astype(jnp.float32), approximate_gelu)
    o_ref[...] = y.astype(o_ref.dtype)


def _round_up(n, m):
    return ((n + m - 1) // m) * m


def _vmem_capacity_bytes():
    """Per-TensorCore VMEM capacity (128 MiB on v5e/v6e, 64 MiB on v7x)."""
    try:
        info = pltpu.get_tpu_info()
        cap = int(getattr(info, "vmem_capacity_bytes", 0))
        if cap > 0:
            return cap
    except Exception:
        pass
    return 64 << 20  # conservative fallback: v7x per-TensorCore VMEM


@functools.partial(
    jax.jit,
    static_argnames=("block_batch", "block_out", "approximate_gelu", "force_tiled"),
)
def two_stage_linear(x, w1, b1, w2, b2, *, block_batch=None, block_out=None,
                     approximate_gelu=False, force_tiled=False):
    """x: (B, D_in); w1: (D_in, D_mid); b1: (D_mid,); w2: (D_mid, D_out); b2: (D_out,).

    Weights are the transpose of PyTorch Linear.weight ([out, in] -> [in, out]).
    """
    B_orig, D_in = x.shape
    D_mid = w1.shape[1]
    D_out = w2.shape[1]

    x_it = jnp.dtype(x.dtype).itemsize
    w_it = jnp.dtype(w1.dtype).itemsize
    sublane = 16 if x.dtype == jnp.bfloat16 else 8

    # Degenerate tiny-batch case only: pad up to one sublane so every batch block
    # start lies inside the array (normal ragged batches use partial blocks, no pad).
    B = B_orig
    if B < sublane:
        x = jnp.pad(x, ((0, sublane - B), (0, 0)))
        B = sublane

    # Lane-dense output: pad D_out to a multiple of 128 (weights-only pad, tiny).
    # The trailing column slice is skipped entirely when D_out is already lane-dense.
    D_out_p = _round_up(D_out, 128)
    if D_out_p != D_out:
        w2 = jnp.pad(w2, ((0, 0), (0, D_out_p - D_out)))
        b2 = jnp.pad(b2, (0, D_out_p - D_out))
    b1_2d = b1.reshape(1, D_mid)
    b2_2d = b2.reshape(1, D_out_p)

    # VMEM budget: ~80% of the chip's per-TensorCore VMEM (portable v5e/v6e/v7x).
    vmem_budget = int(0.8 * _vmem_capacity_bytes())

    # Strategy selection: keep weights fully resident (zero weight re-DMA per batch
    # tile) while their double-buffered footprint stays well inside the budget; fall
    # back to the output-tiled path otherwise (mostly relevant on 64 MiB-VMEM v7x —
    # the same weights can stay resident on 128 MiB v5e/v6e).
    resident_weight_bytes = 2 * (D_in * D_mid + D_mid * D_out_p + D_mid + D_out_p) * w_it
    use_resident = (not force_tiled) and (resident_weight_bytes <= int(0.6 * vmem_budget))

    cost = pl.CostEstimate(
        flops=2 * B * (D_in * D_mid + D_mid * D_out_p),
        transcendentals=B * (D_mid + D_out_p),
        bytes_accessed=(B * D_in + B * D_out_p) * x_it
        + (D_in * D_mid + D_mid * D_out_p + D_mid + D_out_p) * w_it,
    )

    def _pick_tb(fixed_bytes, per_row_bytes):
        # Target ~1 MiB of HBM traffic per grid step (x tile + y tile) so the
        # ~0.35 us/step grid overhead is amortized, bounded by the VMEM budget.
        target_rows = max(256, (1 << 20) // max(1, (D_in + D_out_p) * x_it))
        avail = vmem_budget - fixed_bytes - (4 << 20)      # 4 MiB compiler headroom
        if avail <= 0:
            tb_max = sublane
        else:
            tb_max = max(sublane, (avail // per_row_bytes) // sublane * sublane)
        cap = (B // sublane) * sublane                      # keep block <= array dim
        tb = min(target_rows, tb_max, cap, 2048)
        return max(sublane, (tb // sublane) * sublane)

    if use_resident:
        # Double-buffered x / y tiles + resident (double-buffered) weights + f32 temps.
        per_row = 2 * (D_in + D_out_p) * x_it + 4 * (D_mid + D_out_p)
        tb = block_batch if block_batch is not None else _pick_tb(resident_weight_bytes, per_row)
        assert tb % sublane == 0, f"batch tile {tb} must be a multiple of {sublane}"
        grid = (pl.cdiv(B, tb),)
        needed = resident_weight_bytes + tb * per_row
        vmem_limit = int(min(vmem_budget, max(32 << 20, 2 * needed)))

        out_padded = pl.pallas_call(
            functools.partial(_resident_kernel, approximate_gelu=approximate_gelu),
            out_shape=jax.ShapeDtypeStruct((B, D_out_p), x.dtype),
            grid_spec=pltpu.PrefetchScalarGridSpec(
                num_scalar_prefetch=0,
                grid=grid,
                in_specs=[
                    pl.BlockSpec((tb, D_in), lambda i: (i, 0)),        # x tile (pipelined)
                    pl.BlockSpec((D_in, D_mid), lambda i: (0, 0)),     # W1 (resident)
                    pl.BlockSpec((1, D_mid), lambda i: (0, 0)),        # b1 (resident)
                    pl.BlockSpec((D_mid, D_out_p), lambda i: (0, 0)),  # W2 (resident)
                    pl.BlockSpec((1, D_out_p), lambda i: (0, 0)),      # b2 (resident)
                ],
                out_specs=pl.BlockSpec((tb, D_out_p), lambda i: (i, 0)),
            ),
            compiler_params=pltpu.CompilerParams(
                dimension_semantics=("parallel",),
                vmem_limit_bytes=vmem_limit,
            ),
            cost_estimate=cost,
        )(x, w1, b1_2d, w2, b2_2d)
    else:
        # Output-tiled path: W2/b2 streamed per output tile; stage-1 activation held
        # in a per-batch-tile VMEM scratch and reused across output tiles.
        tn = block_out if block_out is not None else min(512, D_out_p)
        assert tn % 128 == 0, f"output tile {tn} must be a multiple of 128"
        tn = min(tn, D_out_p)
        h_dt = w2.dtype
        h_it = jnp.dtype(h_dt).itemsize
        fixed = 2 * (D_in * D_mid + D_mid) * w_it + 2 * (D_mid * tn + tn) * w_it
        per_row = 2 * D_in * x_it + 2 * tn * x_it + D_mid * h_it + 4 * (D_mid + tn)
        tb = block_batch if block_batch is not None else _pick_tb(fixed, per_row)
        assert tb % sublane == 0, f"batch tile {tb} must be a multiple of {sublane}"
        grid = (pl.cdiv(B, tb), pl.cdiv(D_out_p, tn))
        needed = fixed + tb * per_row
        vmem_limit = int(min(vmem_budget, max(32 << 20, 2 * needed)))

        out_padded = pl.pallas_call(
            functools.partial(_tiled_kernel, approximate_gelu=approximate_gelu),
            out_shape=jax.ShapeDtypeStruct((B, D_out_p), x.dtype),
            grid_spec=pltpu.PrefetchScalarGridSpec(
                num_scalar_prefetch=0,
                grid=grid,
                in_specs=[
                    pl.BlockSpec((tb, D_in), lambda i, j: (i, 0)),     # x (held across j)
                    pl.BlockSpec((D_in, D_mid), lambda i, j: (0, 0)),  # W1 (resident)
                    pl.BlockSpec((1, D_mid), lambda i, j: (0, 0)),     # b1 (resident)
                    pl.BlockSpec((D_mid, tn), lambda i, j: (0, j)),    # W2 tile (streamed)
                    pl.BlockSpec((1, tn), lambda i, j: (0, j)),        # b2 tile (streamed)
                ],
                out_specs=pl.BlockSpec((tb, tn), lambda i, j: (i, j)),
                scratch_shapes=[pltpu.VMEM((tb, D_mid), h_dt)],        # stage-1 activation
            ),
            compiler_params=pltpu.CompilerParams(
                dimension_semantics=("parallel", "arbitrary"),
                vmem_limit_bytes=vmem_limit,
            ),
            cost_estimate=cost,
        )(x, w1, b1_2d, w2, b2_2d)

    out = out_padded
    if B != B_orig:
        out = out[:B_orig]
    if D_out_p != D_out:
        out = out[:, :D_out]
    return out


def reference(x, w1, b1, w2, b2):
    h = jax.nn.gelu(jnp.dot(x, w1, precision=lax.Precision.HIGHEST) + b1, approximate=False)
    return jax.nn.gelu(jnp.dot(h, w2, precision=lax.Precision.HIGHEST) + b2, approximate=False)


def _make_params(key, input_dim, intermediate_dim, output_dim, dtype=jnp.float32):
    k1, k2, k3, k4 = jax.random.split(key, 4)
    # PyTorch Linear stores weight as [out, in]; generate that way then transpose.
    w1_pt = jax.random.normal(k1, (intermediate_dim, input_dim), dtype=jnp.float32) * 0.1
    b1 = jax.random.normal(k2, (intermediate_dim,), dtype=jnp.float32) * 0.1
    w2_pt = jax.random.normal(k3, (output_dim, intermediate_dim), dtype=jnp.float32) * 0.1
    b2 = jax.random.normal(k4, (output_dim,), dtype=jnp.float32) * 0.1
    return (w1_pt.T.astype(dtype), b1.astype(dtype), w2_pt.T.astype(dtype), b2.astype(dtype))


if __name__ == "__main__":
    key = jax.random.PRNGKey(0)
    kp, kx1, kx2, kp2, kx3 = jax.random.split(key, 5)

    # --- 1) f32, resident-weight fast path, dims (32 -> 64 -> 16), batch 512 ---
    input_dim, intermediate_dim, output_dim = 32, 64, 16
    w1, b1, w2, b2 = _make_params(kp, input_dim, intermediate_dim, output_dim)
    x = jax.random.normal(kx1, (512, input_dim), dtype=jnp.float32)

    out = jax.block_until_ready(two_stage_linear(x, w1, b1, w2, b2))
    ref = reference(x, w1, b1, w2, b2)
    assert out.shape == (512, output_dim) and out.dtype == jnp.float32
    assert jnp.allclose(out, ref, atol=1e-5, rtol=1e-5), "f32 resident mismatch"

    # --- 2) bf16, resident path, ragged batch (40) exercises partial batch blocks ---
    xb = x[:40].astype(jnp.bfloat16)
    w1b, b1b, w2b, b2b = (a.astype(jnp.bfloat16) for a in (w1, b1, w2, b2))
    out_b = jax.block_until_ready(two_stage_linear(xb, w1b, b1b, w2b, b2b))
    ref_b = reference(xb.astype(jnp.float32), w1, b1, w2, b2)
    assert out_b.shape == (40, output_dim) and out_b.dtype == jnp.bfloat16
    assert jnp.allclose(out_b.astype(jnp.float32), ref_b, atol=3e-2, rtol=3e-2), \
        "bf16 resident mismatch"

    # --- 3) f32, forced output-tiled path (v7x-style), dims (32 -> 64 -> 192),
    #        ragged batch 300, 2 output tiles: exercises the pl.when(j==0) stage-1
    #        scratch reuse, streamed W2 tiles and the lane-pad column slice ---
    w1t, b1t, w2t, b2t = _make_params(kp2, 32, 64, 192)
    xt = jax.random.normal(kx3, (300, 32), dtype=jnp.float32)
    out_t = jax.block_until_ready(
        two_stage_linear(xt, w1t, b1t, w2t, b2t, force_tiled=True, block_out=128))
    ref_t = reference(xt, w1t, b1t, w2t, b2t)
    assert out_t.shape == (300, 192) and out_t.dtype == jnp.float32
    assert jnp.allclose(out_t, ref_t, atol=1e-5, rtol=1e-5), "f32 tiled mismatch"

    # --- 4) bf16, forced tiled path (covers the bf16 stage-1 scratch dtype) ---
    out_tb = jax.block_until_ready(
        two_stage_linear(xb, w1b, b1b, w2b, b2b, force_tiled=True))
    assert out_tb.shape == (40, output_dim) and out_tb.dtype == jnp.bfloat16
    assert jnp.allclose(out_tb.astype(jnp.float32), ref_b, atol=3e-2, rtol=3e-2), \
        "bf16 tiled mismatch"

    print("KERNEL_OK")
</pallas_src>

<mosaic_0001>
module attributes {stable_mosaic.version = 11 : i64} {
  func.func @_resident_kernel(%arg0: i32, %arg1: memref<512x32xf32, #tpu.memory_space<vmem>>, %arg2: memref<32x64xf32, #tpu.memory_space<vmem>>, %arg3: memref<1x64xf32, #tpu.memory_space<vmem>>, %arg4: memref<64x128xf32, #tpu.memory_space<vmem>>, %arg5: memref<1x128xf32, #tpu.memory_space<vmem>>, %arg6: memref<512x128xf32, #tpu.memory_space<vmem>>) attributes {dimension_semantics = [#tpu.dimension_semantics<parallel>], iteration_bounds = array<i64: 1>, scalar_prefetch = 0 : i64, scratch_operands = 0 : i64, tpu.core_type = #tpu.core_type<tc>, window_params = [{transform_indices = @transform_0, window_bounds = array<i64: 512, 32>}, {pipeline_mode = #tpu.pipeline_mode<synchronous>, transform_indices = @transform_1, window_bounds = array<i64: 32, 64>}, {pipeline_mode = #tpu.pipeline_mode<synchronous>, transform_indices = @transform_2, window_bounds = array<i64: 1, 64>}, {pipeline_mode = #tpu.pipeline_mode<synchronous>, transform_indices = @transform_3, window_bounds = array<i64: 64, 128>}, {pipeline_mode = #tpu.pipeline_mode<synchronous>, transform_indices = @transform_4, window_bounds = array<i64: 1, 128>}, {transform_indices = @transform_5, window_bounds = array<i64: 512, 128>}]} {
    %c0 = arith.constant 0 : index
    %c0_0 = arith.constant 0 : index
    %0 = vector.load %arg1[%c0, %c0_0] : memref<512x32xf32, #tpu.memory_space<vmem>>, vector<512x32xf32>
    %c0_1 = arith.constant 0 : index
    %c0_2 = arith.constant 0 : index
    %1 = vector.load %arg2[%c0_1, %c0_2] : memref<32x64xf32, #tpu.memory_space<vmem>>, vector<32x64xf32>
    %cst = arith.constant dense<0.000000e+00> : vector<512x64xf32>
    %2 = tpu.matmul %0, %1, %cst {dimension_numbers = #tpu.dot_dimension_numbers<[1], [0], [0], [1], [0, 0, 1, 1], [], []>} : vector<512x32xf32>, vector<32x64xf32>, vector<512x64xf32> -> vector<512x64xf32>
    %c0_3 = arith.constant 0 : index
    %c0_4 = arith.constant 0 : index
    %3 = vector.load %arg3[%c0_3, %c0_4] : memref<1x64xf32, #tpu.memory_space<vmem>>, vector<1x64xf32>
    %4 = vector.broadcast %3 : vector<1x64xf32> to vector<512x64xf32>
    %5 = arith.addf %2, %4 : vector<512x64xf32>
    %cst_5 = arith.constant 5.000000e-01 : f32
    %6 = vector.broadcast %cst_5 : f32 to vector<512x64xf32>
    %7 = arith.mulf %6, %5 : vector<512x64xf32>
    %cst_6 = arith.constant 0.707106769 : f32
    %8 = vector.broadcast %cst_6 : f32 to vector<512x64xf32>
    %9 = arith.mulf %5, %8 : vector<512x64xf32>
    %10 = math.erf %9 : vector<512x64xf32>
    %cst_7 = arith.constant 1.000000e+00 : f32
    %11 = vector.broadcast %cst_7 : f32 to vector<512x64xf32>
    %12 = arith.addf %11, %10 : vector<512x64xf32>
    %13 = arith.mulf %7, %12 : vector<512x64xf32>
    %c0_8 = arith.constant 0 : index
    %c0_9 = arith.constant 0 : index
    %14 = vector.load %arg4[%c0_8, %c0_9] : memref<64x128xf32, #tpu.memory_space<vmem>>, vector<64x128xf32>
    %cst_10 = arith.constant dense<0.000000e+00> : vector<512x128xf32>
    %15 = tpu.matmul %13, %14, %cst_10 {dimension_numbers = #tpu.dot_dimension_numbers<[1], [0], [0], [1], [0, 0, 1, 1], [], []>} : vector<512x64xf32>, vector<64x128xf32>, vector<512x128xf32> -> vector<512x128xf32>
    %c0_11 = arith.constant 0 : index
    %c0_12 = arith.constant 0 : index
    %16 = vector.load %arg5[%c0_11, %c0_12] : memref<1x128xf32, #tpu.memory_space<vmem>>, vector<1x128xf32>
    %17 = vector.broadcast %16 : vector<1x128xf32> to vector<512x128xf32>
    %18 = arith.addf %15, %17 : vector<512x128xf32>
    %cst_13 = arith.constant 5.000000e-01 : f32
    %19 = vector.broadcast %cst_13 : f32 to vector<512x128xf32>
    %20 = arith.mulf %19, %18 : vector<512x128xf32>
    %cst_14 = arith.constant 0.707106769 : f32
    %21 = vector.broadcast %cst_14 : f32 to vector<512x128xf32>
    %22 = arith.mulf %18, %21 : vector<512x128xf32>
    %23 = math.erf %22 : vector<512x128xf32>
    %cst_15 = arith.constant 1.000000e+00 : f32
    %24 = vector.broadcast %cst_15 : f32 to vector<512x128xf32>
    %25 = arith.addf %24, %23 : vector<512x128xf32>
    %26 = arith.mulf %20, %25 : vector<512x128xf32>
    %c0_16 = arith.constant 0 : index
    %c0_17 = arith.constant 0 : index
    %27 = vector.load %arg6[%c0_16, %c0_17] : memref<512x128xf32, #tpu.memory_space<vmem>>, vector<512x128xf32>
    tpu.vector_store %arg6[%c0_16, %c0_17], %26 {strides = array<i32>} : memref<512x128xf32, #tpu.memory_space<vmem>>, vector<512x128xf32>,
    return
  }
  func.func @transform_0(%arg0: i32) -> (i32, i32) {
    %c0_i32 = arith.constant 0 : i32
    %c0_i32_0 = arith.constant 0 : i32
    return %arg0, %c0_i32 : i32, i32
  }
  func.func @transform_1(%arg0: i32) -> (i32, i32) {
    %c0_i32 = arith.constant 0 : i32
    %c0_i32_0 = arith.constant 0 : i32
    %c0_i32_1 = arith.constant 0 : i32
    return %c0_i32, %c0_i32_0 : i32, i32
  }
  func.func @transform_2(%arg0: i32) -> (i32, i32) {
    %c0_i32 = arith.constant 0 : i32
    %c0_i32_0 = arith.constant 0 : i32
    %c0_i32_1 = arith.constant 0 : i32
    return %c0_i32, %c0_i32_0 : i32, i32
  }
  func.func @transform_3(%arg0: i32) -> (i32, i32) {
    %c0_i32 = arith.constant 0 : i32
    %c0_i32_0 = arith.constant 0 : i32
    %c0_i32_1 = arith.constant 0 : i32
    return %c0_i32, %c0_i32_0 : i32, i32
  }
  func.func @transform_4(%arg0: i32) -> (i32, i32) {
    %c0_i32 = arith.constant 0 : i32
    %c0_i32_0 = arith.constant 0 : i32
    %c0_i32_1 = arith.constant 0 : i32
    return %c0_i32, %c0_i32_0 : i32, i32
  }
  func.func @transform_5(%arg0: i32) -> (i32, i32) {
    %c0_i32 = arith.constant 0 : i32
    %c0_i32_0 = arith.constant 0 : i32
    return %arg0, %c0_i32 : i32, i32
  }
}

</mosaic_0001>

<llo_original>
// kernel: two_stage_linear.1
$region0: #{two_stage_linear.1}
  #allocation0 [shape = 'u32[]', space=smem, size = 0x4, offset = 0x4, fixed_abs, tag = 'smem constant byte address 0x4 - core index']
  #allocation1 [shape = 'u32[144,128]{1,0:T(1,128)}', space=vmem, size = 0x12000, scoped, tag = 'internal scratch']
  %s0 = inlined_call_operand.vmem [shape: f32[512,32], index: 0, kind: input, shape index: {}]
  %s1 = inlined_call_operand.vmem [shape: f32[32,64], index: 1, kind: input, shape index: {}]
  %s2 = inlined_call_operand.vmem [shape: f32[1,64], index: 2, kind: input, shape index: {}]
  %s3 = inlined_call_operand.vmem [shape: f32[64,128], index: 3, kind: input, shape index: {}]
  %s4 = inlined_call_operand.vmem [shape: f32[1,128], index: 4, kind: input, shape index: {}]
  %s5 = inlined_call_operand.vmem [shape: f32[512,128], index: 5, kind: output, shape index: {}]
  %s6 = sld [smem:[#allocation0]]
  $region30: #{two_stage_linear.1} parent=0
    _
  %s8 = ssub.s32 1, %s6
  %s9 = scalar_select 0, %s8, %s6
  // Predicated region
  $region2: #{two_stage_linear.1} parent=0 // pred_check
    _
  $region3: #{two_stage_linear.1} parent=0 // pred_check_branch
    %11 = sbr.rel (0) target = $region5
  $region4: #{two_stage_linear.1} parent=0 // pred_region
    _
  $region5: #{two_stage_linear.1} parent=0 // pred_fallthru
    _
  // Predicated region
  $region6: #{two_stage_linear.1} parent=0 // pred_check
    _
  $region7: #{two_stage_linear.1} parent=0 // pred_check_branch
    %13 = sbr.rel (0) target = $region9
  $region8: #{two_stage_linear.1} parent=0 // pred_region
    _
  $region9: #{two_stage_linear.1} parent=0 // pred_fallthru
    _
  // Predicated region
  $region10: #{two_stage_linear.1} parent=0 // pred_check
    _
  $region11: #{two_stage_linear.1} parent=0 // pred_check_branch
    %15 = sbr.rel (0) target = $region13
  $region12: #{two_stage_linear.1} parent=0 // pred_region
    _
  $region13: #{two_stage_linear.1} parent=0 // pred_fallthru
    _
  // Predicated region
  $region14: #{two_stage_linear.1} parent=0 // pred_check
    _
  $region15: #{two_stage_linear.1} parent=0 // pred_check_branch
    %17 = sbr.rel (0) target = $region17
  $region16: #{two_stage_linear.1} parent=0 // pred_region
    _
  $region17: #{two_stage_linear.1} parent=0 // pred_fallthru
    _
  // Predicated region
  $region18: #{two_stage_linear.1} parent=0 // pred_check
    _
  $region19: #{two_stage_linear.1} parent=0 // pred_check_branch
    %19 = sbr.rel (0) target = $region21
  $region20: #{two_stage_linear.1} parent=0 // pred_region
    _
  $region21: #{two_stage_linear.1} parent=0 // pred_fallthru
    _
  %v20 = vld [vmem:[%s0] sm:$0xff]
  %v21 = vld [vmem:[%s0 + $0x8] sm:$0xff]
  %v22 = vld [vmem:[%s0 + $0x10] sm:$0xff]
  %v23 = vld [vmem:[%s0 + $0x18] sm:$0xff]
  %v24 = vld [vmem:[%s0 + $0x20] sm:$0xff]
  %v25 = vld [vmem:[%s0 + $0x28] sm:$0xff]
  %v26 = vld [vmem:[%s0 + $0x30] sm:$0xff]
  %v27 = vld [vmem:[%s0 + $0x38] sm:$0xff]
  %v28 = vld [vmem:[%s0 + $0x40] sm:$0xff]
  %v29 = vld [vmem:[%s0 + $0x48] sm:$0xff]
  %v30 = vld [vmem:[%s0 + $0x50] sm:$0xff]
  %v31 = vld [vmem:[%s0 + $0x58] sm:$0xff]
  %v32 = vld [vmem:[%s0 + $0x60] sm:$0xff]
  %v33 = vld [vmem:[%s0 + $0x68] sm:$0xff]
  %v34 = vld [vmem:[%s0 + $0x70] sm:$0xff]
  %v35 = vld [vmem:[%s0 + $0x78] sm:$0xff]
  %v36 = vld [vmem:[%s0 + $0x80] sm:$0xff]
  %v37 = vld [vmem:[%s0 + $0x88] sm:$0xff]
  %v38 = vld [vmem:[%s0 + $0x90] sm:$0xff]
  %v39 = vld [vmem:[%s0 + $0x98] sm:$0xff]
  %v40 = vld [vmem:[%s0 + $0xa0] sm:$0xff]
  %v41 = vld [vmem:[%s0 + $0xa8] sm:$0xff]
  %v42 = vld [vmem:[%s0 + $0xb0] sm:$0xff]
  %v43 = vld [vmem:[%s0 + $0xb8] sm:$0xff]
  %v44 = vld [vmem:[%s0 + $0xc0] sm:$0xff]
  %v45 = vld [vmem:[%s0 + $0xc8] sm:$0xff]
  %v46 = vld [vmem:[%s0 + $0xd0] sm:$0xff]
  %v47 = vld [vmem:[%s0 + $0xd8] sm:$0xff]
  %v48 = vld [vmem:[%s0 + $0xe0] sm:$0xff]
  %v49 = vld [vmem:[%s0 + $0xe8] sm:$0xff]
  %v50 = vld [vmem:[%s0 + $0xf0] sm:$0xff]
  %v51 = vld [vmem:[%s0 + $0xf8] sm:$0xff]
  %v52 = vld [vmem:[%s0 + $0x100] sm:$0xff]
  %v53 = vld [vmem:[%s0 + $0x108] sm:$0xff]
  %v54 = vld [vmem:[%s0 + $0x110] sm:$0xff]
  %v55 = vld [vmem:[%s0 + $0x118] sm:$0xff]
  %v56 = vld [vmem:[%s0 + $0x120] sm:$0xff]
  %v57 = vld [vmem:[%s0 + $0x128] sm:$0xff]
  %v58 = vld [vmem:[%s0 + $0x130] sm:$0xff]
  %v59 = vld [vmem:[%s0 + $0x138] sm:$0xff]
  %v60 = vld [vmem:[%s0 + $0x140] sm:$0xff]
  %v61 = vld [vmem:[%s0 + $0x148] sm:$0xff]
  %v62 = vld [vmem:[%s0 + $0x150] sm:$0xff]
  %v63 = vld [vmem:[%s0 + $0x158] sm:$0xff]
  %v64 = vld [vmem:[%s0 + $0x160] sm:$0xff]
  %v65 = vld [vmem:[%s0 + $0x168] sm:$0xff]
  %v66 = vld [vmem:[%s0 + $0x170] sm:$0xff]
  %v67 = vld [vmem:[%s0 + $0x178] sm:$0xff]
  %v68 = vld [vmem:[%s0 + $0x180] sm:$0xff]
  %v69 = vld [vmem:[%s0 + $0x188] sm:$0xff]
  %v70 = vld [vmem:[%s0 + $0x190] sm:$0xff]
  %v71 = vld [vmem:[%s0 + $0x198] sm:$0xff]
  %v72 = vld [vmem:[%s0 + $0x1a0] sm:$0xff]
  %v73 = vld [vmem:[%s0 + $0x1a8] sm:$0xff]
  %v74 = vld [vmem:[%s0 + $0x1b0] sm:$0xff]
  %v75 = vld [vmem:[%s0 + $0x1b8] sm:$0xff]
  %v76 = vld [vmem:[%s0 + $0x1c0] sm:$0xff]
  %v77 = vld [vmem:[%s0 + $0x1c8] sm:$0xff]
  %v78 = vld [vmem:[%s0 + $0x1d0] sm:$0xff]
  %v79 = vld [vmem:[%s0 + $0x1d8] sm:$0xff]
  %v80 = vld [vmem:[%s0 + $0x1e0] sm:$0xff]
  %v81 = vld [vmem:[%s0 + $0x1e8] sm:$0xff]
  %v82 = vld [vmem:[%s0 + $0x1f0] sm:$0xff]
  %v83 = vld [vmem:[%s0 + $0x1f8] sm:$0xff]
  %v84 = vld [vmem:[%s1] sm:$0xff]
  %v85 = vld [vmem:[%s1 + $0x8] sm:$0xff]
  %v86 = vld [vmem:[%s1 + $0x10] sm:$0xff]
  %v87 = vld [vmem:[%s1 + $0x18] sm:$0xff]
  %v88 = vld [vmem:[%s2] sm:$0x1]
  %v90 = vlaneseq
  %v91 = vshrl.u32 %v90, 7
  %v92 = vsub.s32 0, %v91
  %v93 = vrot.slane %v88, %v92
  %vm95 = vcmask 261120
  %v97 = vsel %vm95, %v20, 0
  %v100 = vsel %vm95, %v21, 0
  %v103 = vsel %vm95, %v22, 0
  %v106 = vsel %vm95, %v23, 0
  %v109 = vsel %vm95, %v24, 0
  %v112 = vsel %vm95, %v25, 0
  %v115 = vsel %vm95, %v26, 0
  %v118 = vsel %vm95, %v27, 0
  %v121 = vsel %vm95, %v28, 0
  %v124 = vsel %vm95, %v29, 0
  %v127 = vsel %vm95, %v30, 0
  %v130 = vsel %vm95, %v31, 0
  %v133 = vsel %vm95, %v32, 0
  %v136 = vsel %vm95, %v33, 0
  %v139 = vsel %vm95, %v34, 0
  %v142 = vsel %vm95, %v35, 0
  %v145 = vsel %vm95, %v36, 0
  %v148 = vsel %vm95, %v37, 0
  %v151 = vsel %vm95, %v38, 0
  %v154 = vsel %vm95, %v39, 0
  %v157 = vsel %vm95, %v40, 0
  %v160 = vsel %vm95, %v41, 0
  %v163 = vsel %vm95, %v42, 0
  %v166 = vsel %vm95, %v43, 0
  %v169 = vsel %vm95, %v44, 0
  %v172 = vsel %vm95, %v45, 0
  %v175 = vsel %vm95, %v46, 0
  %v178 = vsel %vm95, %v47, 0
  %v181 = vsel %vm95, %v48, 0
  %v184 = vsel %vm95, %v49, 0
  %v187 = vsel %vm95, %v50, 0
  %v190 = vsel %vm95, %v51, 0
  %v193 = vsel %vm95, %v52, 0
  %v196 = vsel %vm95, %v53, 0
  %v199 = vsel %vm95, %v54, 0
  %v202 = vsel %vm95, %v55, 0
  %v205 = vsel %vm95, %v56, 0
  %v208 = vsel %vm95, %v57, 0
  %v211 = vsel %vm95, %v58, 0
  %v214 = vsel %vm95, %v59, 0
  %v217 = vsel %vm95, %v60, 0
  %v220 = vsel %vm95, %v61, 0
  %v223 = vsel %vm95, %v62, 0
  %v226 = vsel %vm95, %v63, 0
  %v229 = vsel %vm95, %v64, 0
  %v232 = vsel %vm95, %v65, 0
  %v235 = vsel %vm95, %v66, 0
  %v238 = vsel %vm95, %v67, 0
  %v241 = vsel %vm95, %v68, 0
  %v244 = vsel %vm95, %v69, 0
  %v247 = vsel %vm95, %v70, 0
  %v250 = vsel %vm95, %v71, 0
  %v253 = vsel %vm95, %v72, 0
  %v256 = vsel %vm95, %v73, 0
  %v259 = vsel %vm95, %v74, 0
  %v262 = vsel %vm95, %v75, 0
  %v265 = vsel %vm95, %v76, 0
  %v268 = vsel %vm95, %v77, 0
  %v271 = vsel %vm95, %v78, 0
  %v274 = vsel %vm95, %v79, 0
  %v277 = vsel %vm95, %v80, 0
  %v280 = vsel %vm95, %v81, 0
  %v283 = vsel %vm95, %v82, 0
  %v286 = vsel %vm95, %v83, 0
  %288 = vmatprep.subr.mxu0 0.0
  %289 = vmatpush1.msra.mxu0 %v84
  %290 = vmatprep.subr.mxu0 0.0
  %291 = vmatpush1.msra.mxu0 %v85
  %292 = vmatprep.subr.mxu0 0.0
  %293 = vmatpush1.msra.mxu0 %v86
  %294 = vmatprep.subr.mxu0 0.0
  %295 = vmatpush1.msra.mxu0 %v87
  %296 = vmatprep.subr.mxu0 0.0
  %297 = vmatpush1.msra.mxu0 0.0
  %298 = vmatprep.subr.mxu0 0.0
  %299 = vmatpush1.msra.mxu0 0.0
  %300 = vmatprep.subr.mxu0 0.0
  %301 = vmatpush1.msra.mxu0 0.0
  %302 = vmatprep.subr.mxu0 0.0
  %303 = vmatpush1.msra.mxu0 0.0
  %304 = vmatprep.subr.mxu0 0.0
  %305 = vmatpush1.msra.mxu0 0.0
  %306 = vmatprep.subr.mxu0 0.0
  %307 = vmatpush1.msra.mxu0 0.0
  %308 = vmatprep.subr.mxu0 0.0
  %309 = vmatpush1.msra.mxu0 0.0
  %310 = vmatprep.subr.mxu0 0.0
  %311 = vmatpush1.msra.mxu0 0.0
  %312 = vmatprep.subr.mxu0 0.0
  %313 = vmatpush1.msra.mxu0 0.0
  %314 = vmatprep.subr.mxu0 0.0
  %315 = vmatpush1.msra.mxu0 0.0
  %316 = vmatprep.subr.mxu0 0.0
  %317 = vmatpush1.msra.mxu0 0.0
  %318 = vmatprep.subr.mxu0 0.0
  %319 = vmatpush1.msra.mxu0 0.0
  %320 = vmatprep.subr.mxu0 0.0
  %321 = vmatpush1.msra.mxu0 0.0
  %322 = vmatprep.subr.mxu0 0.0
  %323 = vmatpush1.msra.mxu0 0.0
  %324 = vmatprep.subr.mxu0 0.0
  %325 = vmatpush1.msra.mxu0 0.0
  %326 = vmatprep.subr.mxu0 0.0
  %327 = vmatpush1.msra.mxu0 0.0
  %328 = vmatprep.subr.mxu0 0.0
  %329 = vmatpush1.msra.mxu0 0.0
  %330 = vmatprep.subr.mxu0 0.0
  %331 = vmatpush1.msra.mxu0 0.0
  %332 = vmatprep.subr.mxu0 0.0
  %333 = vmatpush1.msra.mxu0 0.0
  %334 = vmatprep.subr.mxu0 0.0
  %335 = vmatpush1.msra.mxu0 0.0
  %336 = vmatprep.subr.mxu0 0.0
  %337 = vmatpush1.msra.mxu0 0.0
  %338 = vmatprep.subr.mxu0 0.0
  %339 = vmatpush1.msra.mxu0 0.0
  %340 = vmatprep.subr.mxu0 0.0
  %341 = vmatpush1.msra.mxu0 0.0
  %342 = vmatprep.subr.mxu0 0.0
  %343 = vmatpush1.msra.mxu0 0.0
  %344 = vmatprep.subr.mxu0 0.0
  %345 = vmatpush1.msra.mxu0 0.0
  %346 = vmatprep.subr.mxu0 0.0
  %347 = vmatpush1.msra.mxu0 0.0
  %348 = vmatprep.subr.mxu0 0.0
  %349 = vmatpush1.msra.mxu0 0.0
  %350 = vmatprep.subr.mxu0 0.0
  %351 = vmatpush1.msra.mxu0 0.0
  %352 = vmatprep.mubr.f32.mxu0 0.0
  %353 = vmatmul.mubr.f32.gmra.mrb[0].mxu0 %v97
  %v354 = vpop.f32.mrb[0].mxu0
  %v355 = vadd.f32 %v93, %v354
  %v356 = vpop.f32.mrb[0].mxu0
  %357 = vmatprep.mubr.f32.mxu0 0.0
  %358 = vmatmul.mubr.f32.gmra.mrb[0].mxu0 %v100
  %v359 = vpop.f32.mrb[0].mxu0
  %v360 = vadd.f32 %v93, %v359
  %v361 = vpop.f32.mrb[0].mxu0
  %362 = vmatprep.mubr.f32.mxu0 0.0
  %363 = vmatmul.mubr.f32.gmra.mrb[0].mxu0 %v103
  %v364 = vpop.f32.mrb[0].mxu0
  %v365 = vadd.f32 %v93, %v364
  %v366 = vpop.f32.mrb[0].mxu0
  %367 = vmatprep.mubr.f32.mxu0 0.0
  %368 = vmatmul.mubr.f32.gmra.mrb[0].mxu0 %v106
  %v369 = vpop.f32.mrb[0].mxu0
  %v370 = vadd.f32 %v93, %v369
  %v371 = vpop.f32.mrb[0].mxu0
  %372 = vmatprep.mubr.f32.mxu0 0.0
  %373 = vmatmul.mubr.f32.gmra.mrb[0].mxu0 %v109
  %v374 = vpop.f32.mrb[0].mxu0
  %v375 = vadd.f32 %v93, %v374
  %v376 = vpop.f32.mrb[0].mxu0
  %377 = vmatprep.mubr.f32.mxu0 0.0
  %378 = vmatmul.mubr.f32.gmra.mrb[0].mxu0 %v112
  %v379 = vpop.f32.mrb[0].mxu0
  %v380 = vadd.f32 %v93, %v379
  %v381 = vpop.f32.mrb[0].mxu0
  %382 = vmatprep.mubr.f32.mxu0 0.0
  %383 = vmatmul.mubr.f32.gmra.mrb[0].mxu0 %v115
  %v384 = vpop.f32.mrb[0].mxu0
  %v385 = vadd.f32 %v93, %v384
  %v386 = vpop.f32.mrb[0].mxu0
  %387 = vmatprep.mubr.f32.mxu0 0.0
  %388 = vmatmul.mubr.f32.gmra.mrb[0].mxu0 %v118
  %v389 = vpop.f32.mrb[0].mxu0
  %v390 = vadd.f32 %v93, %v389
  %v391 = vpop.f32.mrb[0].mxu0
  %392 = vmatprep.mubr.f32.mxu0 0.0
  %393 = vmatmul.mubr.f32.gmra.mrb[0].mxu0 %v121
  %v394 = vpop.f32.mrb[0].mxu0
  %v395 = vadd.f32 %v93, %v394
  %v396 = vpop.f32.mrb[0].mxu0
  %397 = vmatprep.mubr.f32.mxu0 0.0
  %398 = vmatmul.mubr.f32.gmra.mrb[0].mxu0 %v124
  %v399 = vpop.f32.mrb[0].mxu0
  %v400 = vadd.f32 %v93, %v399
  %v401 = vpop.f32.mrb[0].mxu0
  %402 = vmatprep.mubr.f32.mxu0 0.0
  %403 = vmatmul.mubr.f32.gmra.mrb[0].mxu0 %v127
  %v404 = vpop.f32.mrb[0].mxu0
  %v405 = vadd.f32 %v93, %v404
  %v406 = vpop.f32.mrb[0].mxu0
  %407 = vmatprep.mubr.f32.mxu0 0.0
  %408 = vmatmul.mubr.f32.gmra.mrb[0].mxu0 %v130
  %v409 = vpop.f32.mrb[0].mxu0
  %v410 = vadd.f32 %v93, %v409
  %v411 = vpop.f32.mrb[0].mxu0
  %412 = vmatprep.mubr.f32.mxu0 0.0
  %413 = vmatmul.mubr.f32.gmra.mrb[0].mxu0 %v133
  %v414 = vpop.f32.mrb[0].mxu0
  %v415 = vadd.f32 %v93, %v414
  %v416 = vpop.f32.mrb[0].mxu0
  %417 = vmatprep.mubr.f32.mxu0 0.0
  %418 = vmatmul.mubr.f32.gmra.mrb[0].mxu0 %v136
  %v419 = vpop.f32.mrb[0].mxu0
  %v420 = vadd.f32 %v93, %v419
  %v421 = vpop.f32.mrb[0].mxu0
  %422 = vmatprep.mubr.f32.mxu0 0.0
  %423 = vmatmul.mubr.f32.gmra.mrb[0].mxu0 %v139
  %v424 = vpop.f32.mrb[0].mxu0
  %v425 = vadd.f32 %v93, %v424
  %v426 = vpop.f32.mrb[0].mxu0
  %427 = vmatprep.mubr.f32.mxu0 0.0
  %428 = vmatmul.mubr.f32.gmra.mrb[0].mxu0 %v142
  %v429 = vpop.f32.mrb[0].mxu0
  %v430 = vadd.f32 %v93, %v429
  %v431 = vpop.f32.mrb[0].mxu0
  %432 = vmatprep.mubr.f32.mxu0 0.0
  %433 = vmatmul.mubr.f32.gmra.mrb[0].mxu0 %v145
  %v434 = vpop.f32.mrb[0].mxu0
  %v435 = vadd.f32 %v93, %v434
  %v436 = vpop.f32.mrb[0].mxu0
  %437 = vmatprep.mubr.f32.mxu0 0.0
  %438 = vmatmul.mubr.f32.gmra.mrb[0].mxu0 %v148
  %v439 = vpop.f32.mrb[0].mxu0
  %v440 = vadd.f32 %v93, %v439
  %v441 = vpop.f32.mrb[0].mxu0
  %442 = vmatprep.mubr.f32.mxu0 0.0
  %443 = vmatmul.mubr.f32.gmra.mrb[0].mxu0 %v151
  %v444 = vpop.f32.mrb[0].mxu0
  %v445 = vadd.f32 %v93, %v444
  %v446 = vpop.f32.mrb[0].mxu0
  %447 = vmatprep.mubr.f32.mxu0 0.0
  %448 = vmatmul.mubr.f32.gmra.mrb[0].mxu0 %v154
  %v449 = vpop.f32.mrb[0].mxu0
  %v450 = vadd.f32 %v93, %v449
  %v451 = vpop.f32.mrb[0].mxu0
  %452 = vmatprep.mubr.f32.mxu0 0.0
  %453 = vmatmul.mubr.f32.gmra.mrb[0].mxu0 %v157
  %v454 = vpop.f32.mrb[0].mxu0
  %v455 = vadd.f32 %v93, %v454
  %v456 = vpop.f32.mrb[0].mxu0
  %457 = vmatprep.mubr.f32.mxu0 0.0
  %458 = vmatmul.mubr.f32.gmra.mrb[0].mxu0 %v160
  %v459 = vpop.f32.mrb[0].mxu0
  %v460 = vadd.f32 %v93, %v459
  %v461 = vpop.f32.mrb[0].mxu0
  %462 = vmatprep.mubr.f32.mxu0 0.0
  %463 = vmatmul.mubr.f32.gmra.mrb[0].mxu0 %v163
  %v464 = vpop.f32.mrb[0].mxu0
  %v465 = vadd.f32 %v93, %v464
  %v466 = vpop.f32.mrb[0].mxu0
  %467 = vmatprep.mubr.f32.mxu0 0.0
  %468 = vmatmul.mubr.f32.gmra.mrb[0].mxu0 %v166
  %v469 = vpop.f32.mrb[0].mxu0
  %v470 = vadd.f32 %v93, %v469
  %v471 = vpop.f32.mrb[0].mxu0
  %472 = vmatprep.mubr.f32.mxu0 0.0
  %473 = vmatmul.mubr.f32.gmra.mrb[0].mxu0 %v169
  %v474 = vpop.f32.mrb[0].mxu0
  %v475 = vadd.f32 %v93, %v474
  %v476 = vpop.f32.mrb[0].mxu0
  %477 = vmatprep.mubr.f32.mxu0 0.0
  %478 = vmatmul.mubr.f32.gmra.mrb[0].mxu0 %v172
  %v479 = vpop.f32.mrb[0].mxu0
  %v480 = vadd.f32 %v93, %v479
  %v481 = vpop.f32.mrb[0].mxu0
  %482 = vmatprep.mubr.f32.mxu0 0.0
  %483 = vmatmul.mubr.f32.gmra.mrb[0].mxu0 %v175
  %v484 = vpop.f32.mrb[0].mxu0
  %v485 = vadd.f32 %v93, %v484
  %v486 = vpop.f32.mrb[0].mxu0
  %487 = vmatprep.mubr.f32.mxu0 0.0
  %488 = vmatmul.mubr.f32.gmra.mrb[0].mxu0 %v178
  %v489 = vpop.f32.mrb[0].mxu0
  %v490 = vadd.f32 %v93, %v489
  %v491 = vpop.f32.mrb[0].mxu0
  %492 = vmatprep.mubr.f32.mxu0 0.0
  %493 = vmatmul.mubr.f32.gmra.mrb[0].mxu0 %v181
  %v494 = vpop.f32.mrb[0].mxu0
  %v495 = vadd.f32 %v93, %v494
  %v496 = vpop.f32.mrb[0].mxu0
  %497 = vmatprep.mubr.f32.mxu0 0.0
  %498 = vmatmul.mubr.f32.gmra.mrb[0].mxu0 %v184
  %v499 = vpop.f32.mrb[0].mxu0
  %v500 = vadd.f32 %v93, %v499
  %v501 = vpop.f32.mrb[0].mxu0
  %502 = vmatprep.mubr.f32.mxu0 0.0
  %503 = vmatmul.mubr.f32.gmra.mrb[0].mxu0 %v187
  %v504 = vpop.f32.mrb[0].mxu0
  %v505 = vadd.f32 %v93, %v504
  %v506 = vpop.f32.mrb[0].mxu0
  %507 = vmatprep.mubr.f32.mxu0 0.0
  %508 = vmatmul.mubr.f32.gmra.mrb[0].mxu0 %v190
  %v509 = vpop.f32.mrb[0].mxu0
  %v510 = vadd.f32 %v93, %v509
  %v511 = vpop.f32.mrb[0].mxu0
  %512 = vmatprep.mubr.f32.mxu0 0.0
  %513 = vmatmul.mubr.f32.gmra.mrb[0].mxu0 %v193
  %v514 = vpop.f32.mrb[0].mxu0
  %v515 = vadd.f32 %v93, %v514
  %v516 = vpop.f32.mrb[0].mxu0
  %517 = vmatprep.mubr.f32.mxu0 0.0
  %518 = vmatmul.mubr.f32.gmra.mrb[0].mxu0 %v196
  %v519 = vpop.f32.mrb[0].mxu0
  %v520 = vadd.f32 %v93, %v519
  %v521 = vpop.f32.mrb[0].mxu0
  %522 = vmatprep.mubr.f32.mxu0 0.0
  %523 = vmatmul.mubr.f32.gmra.mrb[0].mxu0 %v199
  %v524 = vpop.f32.mrb[0].mxu0
  %v525 = vadd.f32 %v93, %v524
  %v526 = vpop.f32.mrb[0].mxu0
  %527 = vmatprep.mubr.f32.mxu0 0.0
  %528 = vmatmul.mubr.f32.gmra.mrb[0].mxu0 %v202
  %v529 = vpop.f32.mrb[0].mxu0
  %v530 = vadd.f32 %v93, %v529
  %v531 = vpop.f32.mrb[0].mxu0
  %532 = vmatprep.mubr.f32.mxu0 0.0
  %533 = vmatmul.mubr.f32.gmra.mrb[0].mxu0 %v205
  %v534 = vpop.f32.mrb[0].mxu0
  %v535 = vadd.f32 %v93, %v534
  %v536 = vpop.f32.mrb[0].mxu0
  %537 = vmatprep.mubr.f32.mxu0 0.0
  %538 = vmatmul.mubr.f32.gmra.mrb[0].mxu0 %v208
  %v539 = vpop.f32.mrb[0].mxu0
  %v540 = vadd.f32 %v93, %v539
  %v541 = vpop.f32.mrb[0].mxu0
  %542 = vmatprep.mubr.f32.mxu0 0.0
  %543 = vmatmul.mubr.f32.gmra.mrb[0].mxu0 %v211
  %v544 = vpop.f32.mrb[0].mxu0
  %v545 = vadd.f32 %v93, %v544
  %v546 = vpop.f32.mrb[0].mxu0
  %547 = vmatprep.mubr.f32.mxu0 0.0
  %548 = vmatmul.mubr.f32.gmra.mrb[0].mxu0 %v214
  %v549 = vpop.f32.mrb[0].mxu0
  %v550 = vadd.f32 %v93, %v549
  %v551 = vpop.f32.mrb[0].mxu0
  %552 = vmatprep.mubr.f32.mxu0 0.0
  %553 = vmatmul.mubr.f32.gmra.mrb[0].mxu0 %v217
  %v554 = vpop.f32.mrb[0].mxu0
  %v555 = vadd.f32 %v93, %v554
  %v556 = vpop.f32.mrb[0].mxu0
  %557 = vmatprep.mubr.f32.mxu0 0.0
  %558 = vmatmul.mubr.f32.gmra.mrb[0].mxu0 %v220
  %v559 = vpop.f32.mrb[0].mxu0
  %v560 = vadd.f32 %v93, %v559
  %v561 = vpop.f32.mrb[0].mxu0
  %562 = vmatprep.mubr.f32.mxu0 0.0
  %563 = vmatmul.mubr.f32.gmra.mrb[0].mxu0 %v223
  %v564 = vpop.f32.mrb[0].mxu0
  %v565 = vadd.f32 %v93, %v564
  %v566 = vpop.f32.mrb[0].mxu0
  %567 = vmatprep.mubr.f32.mxu0 0.0
  %568 = vmatmul.mubr.f32.gmra.mrb[0].mxu0 %v226
  %v569 = vpop.f32.mrb[0].mxu0
  %v570 = vadd.f32 %v93, %v569
  %v571 = vpop.f32.mrb[0].mxu0
  %572 = vmatprep.mubr.f32.mxu0 0.0
  %573 = vmatmul.mubr.f32.gmra.mrb[0].mxu0 %v229
  %v574 = vpop.f32.mrb[0].mxu0
  %v575 = vadd.f32 %v93, %v574
  %v576 = vpop.f32.mrb[0].mxu0
  %577 = vmatprep.mubr.f32.mxu0 0.0
  %578 = vmatmul.mubr.f32.gmra.mrb[0].mxu0 %v232
  %v579 = vpop.f32.mrb[0].mxu0
  %v580 = vadd.f32 %v93, %v579
  %v581 = vpop.f32.mrb[0].mxu0
  %582 = vmatprep.mubr.f32.mxu0 0.0
  %583 = vmatmul.mubr.f32.gmra.mrb[0].mxu0 %v235
  %v584 = vpop.f32.mrb[0].mxu0
  %v585 = vadd.f32 %v93, %v584
  %v586 = vpop.f32.mrb[0].mxu0
  %587 = vmatprep.mubr.f32.mxu0 0.0
  %588 = vmatmul.mubr.f32.gmra.mrb[0].mxu0 %v238
  %v589 = vpop.f32.mrb[0].mxu0
  %v590 = vadd.f32 %v93, %v589
  %v591 = vpop.f32.mrb[0].mxu0
  %592 = vmatprep.mubr.f32.mxu0 0.0
  %593 = vmatmul.mubr.f32.gmra.mrb[0].mxu0 %v241
  %v594 = vpop.f32.mrb[0].mxu0
  %v595 = vadd.f32 %v93, %v594
  %v596 = vpop.f32.mrb[0].mxu0
  %597 = vmatprep.mubr.f32.mxu0 0.0
  %598 = vmatmul.mubr.f32.gmra.mrb[0].mxu0 %v244
  %v599 = vpop.f32.mrb[0].mxu0
  %v600 = vadd.f32 %v93, %v599
  %v601 = vpop.f32.mrb[0].mxu0
  %602 = vmatprep.mubr.f32.mxu0 0.0
  %603 = vmatmul.mubr.f32.gmra.mrb[0].mxu0 %v247
  %v604 = vpop.f32.mrb[0].mxu0
  %v605 = vadd.f32 %v93, %v604
  %v606 = vpop.f32.mrb[0].mxu0
  %607 = vmatprep.mubr.f32.mxu0 0.0
  %608 = vmatmul.mubr.f32.gmra.mrb[0].mxu0 %v250
  %v609 = vpop.f32.mrb[0].mxu0
  %v610 = vadd.f32 %v93, %v609
  %v611 = vpop.f32.mrb[0].mxu0
  %612 = vmatprep.mubr.f32.mxu0 0.0
  %613 = vmatmul.mubr.f32.gmra.mrb[0].mxu0 %v253
  %v614 = vpop.f32.mrb[0].mxu0
  %v615 = vadd.f32 %v93, %v614
  %v616 = vpop.f32.mrb[0].mxu0
  %617 = vmatprep.mubr.f32.mxu0 0.0
  %618 = vmatmul.mubr.f32.gmra.mrb[0].mxu0 %v256
  %v619 = vpop.f32.mrb[0].mxu0
  %v620 = vadd.f32 %v93, %v619
  %v621 = vpop.f32.mrb[0].mxu0
  %622 = vmatprep.mubr.f32.mxu0 0.0
  %623 = vmatmul.mubr.f32.gmra.mrb[0].mxu0 %v259
  %v624 = vpop.f32.mrb[0].mxu0
  %v625 = vadd.f32 %v93, %v624
  %v626 = vpop.f32.mrb[0].mxu0
  %627 = vmatprep.mubr.f32.mxu0 0.0
  %628 = vmatmul.mubr.f32.gmra.mrb[0].mxu0 %v262
  %v629 = vpop.f32.mrb[0].mxu0
  %v630 = vadd.f32 %v93, %v629
  %v631 = vpop.f32.mrb[0].mxu0
  %632 = vmatprep.mubr.f32.mxu0 0.0
  %633 = vmatmul.mubr.f32.gmra.mrb[0].mxu0 %v265
  %v634 = vpop.f32.mrb[0].mxu0
  %v635 = vadd.f32 %v93, %v634
  %v636 = vpop.f32.mrb[0].mxu0
  %637 = vmatprep.mubr.f32.mxu0 0.0
  %638 = vmatmul.mubr.f32.gmra.mrb[0].mxu0 %v268
  %v639 = vpop.f32.mrb[0].mxu0
  %v640 = vadd.f32 %v93, %v639
  %v641 = vpop.f32.mrb[0].mxu0
  %642 = vmatprep.mubr.f32.mxu0 0.0
  %643 = vmatmul.mubr.f32.gmra.mrb[0].mxu0 %v271
  %v644 = vpop.f32.mrb[0].mxu0
  %v645 = vadd.f32 %v93, %v644
  %v646 = vpop.f32.mrb[0].mxu0
  %647 = vmatprep.mubr.f32.mxu0 0.0
  %648 = vmatmul.mubr.f32.gmra.mrb[0].mxu0 %v274
  %v649 = vpop.f32.mrb[0].mxu0
  %v650 = vadd.f32 %v93, %v649
  %v651 = vpop.f32.mrb[0].mxu0
  %652 = vmatprep.mubr.f32.mxu0 0.0
  %653 = vmatmul.mubr.f32.gmra.mrb[0].mxu0 %v277
  %v654 = vpop.f32.mrb[0].mxu0
  %v655 = vadd.f32 %v93, %v654
  %v656 = vpop.f32.mrb[0].mxu0
  %657 = vmatprep.mubr.f32.mxu0 0.0
  %658 = vmatmul.mubr.f32.gmra.mrb[0].mxu0 %v280
  %v659 = vpop.f32.mrb[0].mxu0
  %v660 = vadd.f32 %v93, %v659
  %v661 = vpop.f32.mrb[0].mxu0
  %662 = vmatprep.mubr.f32.mxu0 0.0
  %663 = vmatmul.mubr.f32.gmra.mrb[0].mxu0 %v283
  %v664 = vpop.f32.mrb[0].mxu0
  %v665 = vadd.f32 %v93, %v664
  %v666 = vpop.f32.mrb[0].mxu0
  %667 = vmatprep.mubr.f32.mxu0 0.0
  %668 = vmatmul.mubr.f32.gmra.mrb[0].mxu0 %v286
  %v669 = vpop.f32.mrb[0].mxu0
  %v670 = vadd.f32 %v93, %v669
  %v671 = vpop.f32.mrb[0].mxu0
  %672 = vdwg.mxu0
  %v673 = vmul.f32 %v355, 0.5
  %v674 = vmul.f32 %v360, 0.5
  %v675 = vmul.f32 %v365, 0.5
  %v676 = vmul.f32 %v370, 0.5
  %v677 = vmul.f32 %v375, 0.5
  %v678 = vmul.f32 %v380, 0.5
  %v679 = vmul.f32 %v385, 0.5
  %v680 = vmul.f32 %v390, 0.5
  %v681 = vmul.f32 %v395, 0.5
  %v682 = vmul.f32 %v400, 0.5
  %v683 = vmul.f32 %v405, 0.5
  %v684 = vmul.f32 %v410, 0.5
  %v685 = vmul.f32 %v415, 0.5
  %v686 = vmul.f32 %v420, 0.5
  %v687 = vmul.f32 %v425, 0.5
  %v688 = vmul.f32 %v430, 0.5
  %v689 = vmul.f32 %v435, 0.5
  %v690 = vmul.f32 %v440, 0.5
  %v691 = vmul.f32 %v445, 0.5
  %v692 = vmul.f32 %v450, 0.5
  %v693 = vmul.f32 %v455, 0.5
  %v694 = vmul.f32 %v460, 0.5
  %v695 = vmul.f32 %v465, 0.5
  %v696 = vmul.f32 %v470, 0.5
  %v697 = vmul.f32 %v475, 0.5
  %v698 = vmul.f32 %v480, 0.5
  %v699 = vmul.f32 %v485, 0.5
  %v700 = vmul.f32 %v490, 0.5
  %v701 = vmul.f32 %v495, 0.5
  %v702 = vmul.f32 %v500, 0.5
  %v703 = vmul.f32 %v505, 0.5
  %v704 = vmul.f32 %v510, 0.5
  %v705 = vmul.f32 %v515, 0.5
  %v706 = vmul.f32 %v520, 0.5
  %v707 = vmul.f32 %v525, 0.5
  %v708 = vmul.f32 %v530, 0.5
  %v709 = vmul.f32 %v535, 0.5
  %v710 = vmul.f32 %v540, 0.5
  %v711 = vmul.f32 %v545, 0.5
  %v712 = vmul.f32 %v550, 0.5
  %v713 = vmul.f32 %v555, 0.5
  %v714 = vmul.f32 %v560, 0.5
  %v715 = vmul.f32 %v565, 0.5
  %v716 = vmul.f32 %v570, 0.5
  %v717 = vmul.f32 %v575, 0.5
  %v718 = vmul.f32 %v580, 0.5
  %v719 = vmul.f32 %v585, 0.5
  %v720 = vmul.f32 %v590, 0.5
  %v721 = vmul.f32 %v595, 0.5
  %v722 = vmul.f32 %v600, 0.5
  %v723 = vmul.f32 %v605, 0.5
  %v724 = vmul.f32 %v610, 0.5
  %v725 = vmul.f32 %v615, 0.5
  %v726 = vmul.f32 %v620, 0.5
  %v727 = vmul.f32 %v625, 0.5
  %v728 = vmul.f32 %v630, 0.5
  %v729 = vmul.f32 %v635, 0.5
  %v730 = vmul.f32 %v640, 0.5
  %v731 = vmul.f32 %v645, 0.5
  %v732 = vmul.f32 %v650, 0.5
  %v733 = vmul.f32 %v655, 0.5
  %v734 = vmul.f32 %v660, 0.5
  %v735 = vmul.f32 %v665, 0.5
  %v736 = vmul.f32 %v670, 0.5
  %v737 = vmul.f32 %v355, 0.70710677
  %v738 = vmul.f32 %v360, 0.70710677
  %v739 = vmul.f32 %v365, 0.70710677
  %v740 = vmul.f32 %v370, 0.70710677
  %v741 = vmul.f32 %v375, 0.70710677
  %v742 = vmul.f32 %v380, 0.70710677
  %v743 = vmul.f32 %v385, 0.70710677
  %v744 = vmul.f32 %v390, 0.70710677
  %v745 = vmul.f32 %v395, 0.70710677
  %v746 = vmul.f32 %v400, 0.70710677
  %v747 = vmul.f32 %v405, 0.70710677
  %v748 = vmul.f32 %v410, 0.70710677
  %v749 = vmul.f32 %v415, 0.70710677
  %v750 = vmul.f32 %v420, 0.70710677
  %v751 = vmul.f32 %v425, 0.70710677
  %v752 = vmul.f32 %v430, 0.70710677
  %v753 = vmul.f32 %v435, 0.70710677
  %v754 = vmul.f32 %v440, 0.70710677
  %v755 = vmul.f32 %v445, 0.70710677
  %v756 = vmul.f32 %v450, 0.70710677
  %v757 = vmul.f32 %v455, 0.70710677
  %v758 = vmul.f32 %v460, 0.70710677
  %v759 = vmul.f32 %v465, 0.70710677
  %v760 = vmul.f32 %v470, 0.70710677
  %v761 = vmul.f32 %v475, 0.70710677
  %v762 = vmul.f32 %v480, 0.70710677
  %v763 = vmul.f32 %v485, 0.70710677
  %v764 = vmul.f32 %v490, 0.70710677
  %v765 = vmul.f32 %v495, 0.70710677
  %v766 = vmul.f32 %v500, 0.70710677
  %v767 = vmul.f32 %v505, 0.70710677
  %v768 = vmul.f32 %v510, 0.70710677
  %v769 = vmul.f32 %v515, 0.70710677
  %v770 = vmul.f32 %v520, 0.70710677
  %v771 = vmul.f32 %v525, 0.70710677
  %v772 = vmul.f32 %v530, 0.70710677
  %v773 = vmul.f32 %v535, 0.70710677
  %v774 = vmul.f32 %v540, 0.70710677
  %v775 = vmul.f32 %v545, 0.70710677
  %v776 = vmul.f32 %v550, 0.70710677
  %v777 = vmul.f32 %v555, 0.70710677
  %v778 = vmul.f32 %v560, 0.70710677
  %v779 = vmul.f32 %v565, 0.70710677
  %v780 = vmul.f32 %v570, 0.70710677
  %v781 = vmul.f32 %v575, 0.70710677
  %v782 = vmul.f32 %v580, 0.70710677
  %v783 = vmul.f32 %v585, 0.70710677
  %v784 = vmul.f32 %v590, 0.70710677
  %v785 = vmul.f32 %v595, 0.70710677
  %v786 = vmul.f32 %v600, 0.70710677
  %v787 = vmul.f32 %v605, 0.70710677
  %v788 = vmul.f32 %v610, 0.70710677
  %v789 = vmul.f32 %v615, 0.70710677
  %v790 = vmul.f32 %v620, 0.70710677
  %v791 = vmul.f32 %v625, 0.70710677
  %v792 = vmul.f32 %v630, 0.70710677
  %v793 = vmul.f32 %v635, 0.70710677
  %v794 = vmul.f32 %v640, 0.70710677
  %v795 = vmul.f32 %v645, 0.70710677
  %v796 = vmul.f32 %v650, 0.70710677
  %v797 = vmul.f32 %v655, 0.70710677
  %v798 = vmul.f32 %v660, 0.70710677
  %v799 = vmul.f32 %v665, 0.70710677
  %v800 = vmul.f32 %v670, 0.70710677
  %v801 = verf.f32.pop %v737
  %v802 = verf.f32.pop %v738
  %v803 = verf.f32.pop %v739
  %v804 = verf.f32.pop %v740
  %v805 = verf.f32.pop %v741
  %v806 = verf.f32.pop %v742
  %v807 = verf.f32.pop %v743
  %v808 = verf.f32.pop %v744
  %v809 = verf.f32.pop %v745
  %v810 = verf.f32.pop %v746
  %v811 = verf.f32.pop %v747
  %v812 = verf.f32.pop %v748
  %v813 = verf.f32.pop %v749
  %v814 = verf.f32.pop %v750
  %v815 = verf.f32.pop %v751
  %v816 = verf.f32.pop %v752
  %v817 = verf.f32.pop %v753
  %v818 = verf.f32.pop %v754
  %v819 = verf.f32.pop %v755
  %v820 = verf.f32.pop %v756
  %v821 = verf.f32.pop %v757
  %v822 = verf.f32.pop %v758
  %v823 = verf.f32.pop %v759
  %v824 = verf.f32.pop %v760
  %v825 = verf.f32.pop %v761
  %v826 = verf.f32.pop %v762
  %v827 = verf.f32.pop %v763
  %v828 = verf.f32.pop %v764
  %v829 = verf.f32.pop %v765
  %v830 = verf.f32.pop %v766
  %v831 = verf.f32.pop %v767
  %v832 = verf.f32.pop %v768
  %v833 = verf.f32.pop %v769
  %v834 = verf.f32.pop %v770
  %v835 = verf.f32.pop %v771
  %v836 = verf.f32.pop %v772
  %v837 = verf.f32.pop %v773
  %v838 = verf.f32.pop %v774
  %v839 = verf.f32.pop %v775
  %v840 = verf.f32.pop %v776
  %v841 = verf.f32.pop %v777
  %v842 = verf.f32.pop %v778
  %v843 = verf.f32.pop %v779
  %v844 = verf.f32.pop %v780
  %v845 = verf.f32.pop %v781
  %v846 = verf.f32.pop %v782
  %v847 = verf.f32.pop %v783
  %v848 = verf.f32.pop %v784
  %v849 = verf.f32.pop %v785
  %v850 = verf.f32.pop %v786
  %v851 = verf.f32.pop %v787
  %v852 = verf.f32.pop %v788
  %v853 = verf.f32.pop %v789
  %v854 = verf.f32.pop %v790
  %v855 = verf.f32.pop %v791
  %v856 = verf.f32.pop %v792
  %v857 = verf.f32.pop %v793
  %v858 = verf.f32.pop %v794
  %v859 = verf.f32.pop %v795
  %v860 = verf.f32.pop %v796
  %v861 = verf.f32.pop %v797
  %v862 = verf.f32.pop %v798
  %v863 = verf.f32.pop %v799
  %v864 = verf.f32.pop %v800
  %v865 = vadd.f32 %v801, 1.0
  %v866 = vadd.f32 %v802, 1.0
  %v867 = vadd.f32 %v803, 1.0
  %v868 = vadd.f32 %v804, 1.0
  %v869 = vadd.f32 %v805, 1.0
  %v870 = vadd.f32 %v806, 1.0
  %v871 = vadd.f32 %v807, 1.0
  %v872 = vadd.f32 %v808, 1.0
  %v873 = vadd.f32 %v809, 1.0
  %v874 = vadd.f32 %v810, 1.0
  %v875 = vadd.f32 %v811, 1.0
  %v876 = vadd.f32 %v812, 1.0
  %v877 = vadd.f32 %v813, 1.0
  %v878 = vadd.f32 %v814, 1.0
  %v879 = vadd.f32 %v815, 1.0
  %v880 = vadd.f32 %v816, 1.0
  %v881 = vadd.f32 %v817, 1.0
  %v882 = vadd.f32 %v818, 1.0
  %v883 = vadd.f32 %v819, 1.0
  %v884 = vadd.f32 %v820, 1.0
  %v885 = vadd.f32 %v821, 1.0
  %v886 = vadd.f32 %v822, 1.0
  %v887 = vadd.f32 %v823, 1.0
  %v888 = vadd.f32 %v824, 1.0
  %v889 = vadd.f32 %v825, 1.0
  %v890 = vadd.f32 %v826, 1.0
  %v891 = vadd.f32 %v827, 1.0
  %v892 = vadd.f32 %v828, 1.0
  %v893 = vadd.f32 %v829, 1.0
  %v894 = vadd.f32 %v830, 1.0
  %v895 = vadd.f32 %v831, 1.0
  %v896 = vadd.f32 %v832, 1.0
  %v897 = vadd.f32 %v833, 1.0
  %v898 = vadd.f32 %v834, 1.0
  %v899 = vadd.f32 %v835, 1.0
  %v900 = vadd.f32 %v836, 1.0
  %v901 = vadd.f32 %v837, 1.0
  %v902 = vadd.f32 %v838, 1.0
  %v903 = vadd.f32 %v839, 1.0
  %v904 = vadd.f32 %v840, 1.0
  %v905 = vadd.f32 %v841, 1.0
  %v906 = vadd.f32 %v842, 1.0
  %v907 = vadd.f32 %v843, 1.0
  %v908 = vadd.f32 %v844, 1.0
  %v909 = vadd.f32 %v845, 1.0
  %v910 = vadd.f32 %v846, 1.0
  %v911 = vadd.f32 %v847, 1.0
  %v912 = vadd.f32 %v848, 1.0
  %v913 = vadd.f32 %v849, 1.0
  %v914 = vadd.f32 %v850, 1.0
  %v915 = vadd.f32 %v851, 1.0
  %v916 = vadd.f32 %v852, 1.0
  %v917 = vadd.f32 %v853, 1.0
  %v918 = vadd.f32 %v854, 1.0
  %v919 = vadd.f32 %v855, 1.0
  %v920 = vadd.f32 %v856, 1.0
  %v921 = vadd.f32 %v857, 1.0
  %v922 = vadd.f32 %v858, 1.0
  %v923 = vadd.f32 %v859, 1.0
  %v924 = vadd.f32 %v860, 1.0
  %v925 = vadd.f32 %v861, 1.0
  %v926 = vadd.f32 %v862, 1.0
  %v927 = vadd.f32 %v863, 1.0
  %v928 = vadd.f32 %v864, 1.0
  %v929 = vmul.f32 %v673, %v865
  %v930 = vmul.f32 %v674, %v866
  %v931 = vmul.f32 %v675, %v867
  %v932 = vmul.f32 %v676, %v868
  %v933 = vmul.f32 %v677, %v869
  %v934 = vmul.f32 %v678, %v870
  %v935 = vmul.f32 %v679, %v871
  %v936 = vmul.f32 %v680, %v872
  %v937 = vmul.f32 %v681, %v873
  %v938 = vmul.f32 %v682, %v874
  %v939 = vmul.f32 %v683, %v875
  %v940 = vmul.f32 %v684, %v876
  %v941 = vmul.f32 %v685, %v877
  %v942 = vmul.f32 %v686, %v878
  %v943 = vmul.f32 %v687, %v879
  %v944 = vmul.f32 %v688, %v880
  %v945 = vmul.f32 %v689, %v881
  %v946 = vmul.f32 %v690, %v882
  %v947 = vmul.f32 %v691, %v883
  %v948 = vmul.f32 %v692, %v884
  %v949 = vmul.f32 %v693, %v885
  %v950 = vmul.f32 %v694, %v886
  %v951 = vmul.f32 %v695, %v887
  %v952 = vmul.f32 %v696, %v888
  %v953 = vmul.f32 %v697, %v889
  %v954 = vmul.f32 %v698, %v890
  %v955 = vmul.f32 %v699, %v891
  %v956 = vmul.f32 %v700, %v892
  %v957 = vmul.f32 %v701, %v893
  %v958 = vmul.f32 %v702, %v894
  %v959 = vmul.f32 %v703, %v895
  %v960 = vmul.f32 %v704, %v896
  %v961 = vmul.f32 %v705, %v897
  %v962 = vmul.f32 %v706, %v898
  %v963 = vmul.f32 %v707, %v899
  %v964 = vmul.f32 %v708, %v900
  %v965 = vmul.f32 %v709, %v901
  %v966 = vmul.f32 %v710, %v902
  %v967 = vmul.f32 %v711, %v903
  %v968 = vmul.f32 %v712, %v904
  %v969 = vmul.f32 %v713, %v905
  %v970 = vmul.f32 %v714, %v906
  %v971 = vmul.f32 %v715, %v907
  %v972 = vmul.f32 %v716, %v908
  %v973 = vmul.f32 %v717, %v909
  %v974 = vmul.f32 %v718, %v910
  %v975 = vmul.f32 %v719, %v911
  %v976 = vmul.f32 %v720, %v912
  %v977 = vmul.f32 %v721, %v913
  %v978 = vmul.f32 %v722, %v914
  %v979 = vmul.f32 %v723, %v915
  %v980 = vmul.f32 %v724, %v916
  %v981 = vmul.f32 %v725, %v917
  %v982 = vmul.f32 %v726, %v918
  %v983 = vmul.f32 %v727, %v919
  %v984 = vmul.f32 %v728, %v920
  %v985 = vmul.f32 %v729, %v921
  %v986 = vmul.f32 %v730, %v922
  %v987 = vmul.f32 %v731, %v923
  %v988 = vmul.f32 %v732, %v924
  %v989 = vmul.f32 %v733, %v925
  %v990 = vmul.f32 %v734, %v926
  %v991 = vmul.f32 %v735, %v927
  %v992 = vmul.f32 %v736, %v928
  %v993 = vld [vmem:[%s3] sm:$0xff]
  %v994 = vld [vmem:[%s3 + $0x8] sm:$0xff]
  %v995 = vld [vmem:[%s3 + $0x10] sm:$0xff]
  %v996 = vld [vmem:[%s3 + $0x18] sm:$0xff]
  %v997 = vld [vmem:[%s3 + $0x20] sm:$0xff]
  %v998 = vld [vmem:[%s3 + $0x28] sm:$0xff]
  %v999 = vld [vmem:[%s3 + $0x30] sm:$0xff]
  %v1000 = vld [vmem:[%s3 + $0x38] sm:$0xff]
  %v1001 = vld [vmem:[%s4] sm:$0x1]
  %v1003 = vlaneseq
  %v1004 = vshrl.u32 %v1003, 7
  %v1005 = vsub.s32 0, %v1004
  %v1006 = vrot.slane %v1001, %v1005
  %vm1008 = vcmask 523264
  %v1010 = vsel %vm1008, %v929, 0
  %v1013 = vsel %vm1008, %v930, 0
  %v1016 = vsel %vm1008, %v931, 0
  %v1019 = vsel %vm1008, %v932, 0
  %v1022 = vsel %vm1008, %v933, 0
  %v1025 = vsel %vm1008, %v934, 0
  %v1028 = vsel %vm1008, %v935, 0
  %v1031 = vsel %vm1008, %v936, 0
  %v1034 = vsel %vm1008, %v937, 0
  %v1037 = vsel %vm1008, %v938, 0
  %v1040 = vsel %vm1008, %v939, 0
  %v1043 = vsel %vm1008, %v940, 0
  %v1046 = vsel %vm1008, %v941, 0
  %v1049 = vsel %vm1008, %v942, 0
  %v1052 = vsel %vm1008, %v943, 0
  %v1055 = vsel %vm1008, %v944, 0
  %v1058 = vsel %vm1008, %v945, 0
  %v1061 = vsel %vm1008, %v946, 0
  %v1064 = vsel %vm1008, %v947, 0
  %v1067 = vsel %vm1008, %v948, 0
  %v1070 = vsel %vm1008, %v949, 0
  %v1073 = vsel %vm1008, %v950, 0
  %v1076 = vsel %vm1008, %v951, 0
  %v1079 = vsel %vm1008, %v952, 0
  %v1082 = vsel %vm1008, %v953, 0
  %v1085 = vsel %vm1008, %v954, 0
  %v1088 = vsel %vm1008, %v955, 0
  %v1091 = vsel %vm1008, %v956, 0
  %v1094 = vsel %vm1008, %v957, 0
  %v1097 = vsel %vm1008, %v958, 0
  %v1100 = vsel %vm1008, %v959, 0
  %v1103 = vsel %vm1008, %v960, 0
  %v1106 = vsel %vm1008, %v961, 0
  %v1109 = vsel %vm1008, %v962, 0
  %v1112 = vsel %vm1008, %v963, 0
  %v1115 = vsel %vm1008, %v964, 0
  %v1118 = vsel %vm1008, %v965, 0
  %v1121 = vsel %vm1008, %v966, 0
  %v1124 = vsel %vm1008, %v967, 0
  %v1127 = vsel %vm1008, %v968, 0
  %v1130 = vsel %vm1008, %v969, 0
  %v1133 = vsel %vm1008, %v970, 0
  %v1136 = vsel %vm1008, %v971, 0
  %v1139 = vsel %vm1008, %v972, 0
  %v1142 = vsel %vm1008, %v973, 0
  %v1145 = vsel %vm1008, %v974, 0
  %v1148 = vsel %vm1008, %v975, 0
  %v1151 = vsel %vm1008, %v976, 0
  %v1154 = vsel %vm1008, %v977, 0
  %v1157 = vsel %vm1008, %v978, 0
  %v1160 = vsel %vm1008, %v979, 0
  %v1163 = vsel %vm1008, %v980, 0
  %v1166 = vsel %vm1008, %v981, 0
  %v1169 = vsel %vm1008, %v982, 0
  %v1172 = vsel %vm1008, %v983, 0
  %v1175 = vsel %vm1008, %v984, 0
  %v1178 = vsel %vm1008, %v985, 0
  %v1181 = vsel %vm1008, %v986, 0
  %v1184 = vsel %vm1008, %v987, 0
  %v1187 = vsel %vm1008, %v988, 0
  %v1190 = vsel %vm1008, %v989, 0
  %v1193 = vsel %vm1008, %v990, 0
  %v1196 = vsel %vm1008, %v991, 0
  %v1199 = vsel %vm1008, %v992, 0
  %1201 = vmatprep.subr.mxu0 0.0
  %1202 = vmatpush1.msra.mxu0 %v993
  %1203 = vmatprep.subr.mxu0 0.0
  %1204 = vmatpush1.msra.mxu0 %v994
  %1205 = vmatprep.subr.mxu0 0.0
  %1206 = vmatpush1.msra.mxu0 %v995
  %1207 = vmatprep.subr.mxu0 0.0
  %1208 = vmatpush1.msra.mxu0 %v996
  %1209 = vmatprep.subr.mxu0 0.0
  %1210 = vmatpush1.msra.mxu0 %v997
  %1211 = vmatprep.subr.mxu0 0.0
  %1212 = vmatpush1.msra.mxu0 %v998
  %1213 = vmatprep.subr.mxu0 0.0
  %1214 = vmatpush1.msra.mxu0 %v999
  %1215 = vmatprep.subr.mxu0 0.0
  %1216 = vmatpush1.msra.mxu0 %v1000
  %1217 = vmatprep.subr.mxu0 0.0
  %1218 = vmatpush1.msra.mxu0 0.0
  %1219 = vmatprep.subr.mxu0 0.0
  %1220 = vmatpush1.msra.mxu0 0.0
  %1221 = vmatprep.subr.mxu0 0.0
  %1222 = vmatpush1.msra.mxu0 0.0
  %1223 = vmatprep.subr.mxu0 0.0
  %1224 = vmatpush1.msra.mxu0 0.0
  %1225 = vmatprep.subr.mxu0 0.0
  %1226 = vmatpush1.msra.mxu0 0.0
  %1227 = vmatprep.subr.mxu0 0.0
  %1228 = vmatpush1.msra.mxu0 0.0
  %1229 = vmatprep.subr.mxu0 0.0
  %1230 = vmatpush1.msra.mxu0 0.0
  %1231 = vmatprep.subr.mxu0 0.0
  %1232 = vmatpush1.msra.mxu0 0.0
  %1233 = vmatprep.subr.mxu0 0.0
  %1234 = vmatpush1.msra.mxu0 0.0
  %1235 = vmatprep.subr.mxu0 0.0
  %1236 = vmatpush1.msra.mxu0 0.0
  %1237 = vmatprep.subr.mxu0 0.0
  %1238 = vmatpush1.msra.mxu0 0.0
  %1239 = vmatprep.subr.mxu0 0.0
  %1240 = vmatpush1.msra.mxu0 0.0
  %1241 = vmatprep.subr.mxu0 0.0
  %1242 = vmatpush1.msra.mxu0 0.0
  %1243 = vmatprep.subr.mxu0 0.0
  %1244 = vmatpush1.msra.mxu0 0.0
  %1245 = vmatprep.subr.mxu0 0.0
  %1246 = vmatpush1.msra.mxu0 0.0
  %1247 = vmatprep.subr.mxu0 0.0
  %1248 = vmatpush1.msra.mxu0 0.0
  %1249 = vmatprep.subr.mxu0 0.0
  %1250 = vmatpush1.msra.mxu0 0.0
  %1251 = vmatprep.subr.mxu0 0.0
  %1252 = vmatpush1.msra.mxu0 0.0
  %1253 = vmatprep.subr.mxu0 0.0
  %1254 = vmatpush1.msra.mxu0 0.0
  %1255 = vmatprep.subr.mxu0 0.0
  %1256 = vmatpush1.msra.mxu0 0.0
  %1257 = vmatprep.subr.mxu0 0.0
  %1258 = vmatpush1.msra.mxu0 0.0
  %1259 = vmatprep.subr.mxu0 0.0
  %1260 = vmatpush1.msra.mxu0 0.0
  %1261 = vmatprep.subr.mxu0 0.0
  %1262 = vmatpush1.msra.mxu0 0.0
  %1263 = vmatprep.subr.mxu0 0.0
  %1264 = vmatpush1.msra.mxu0 0.0
  %1265 = vmatprep.mubr.f32.mxu0 0.0
  %1266 = vmatmul.mubr.f32.gmra.mrb[0].mxu0 %v1010
  %v1267 = vpop.f32.mrb[0].mxu0
  %v1268 = vadd.f32 %v1006, %v1267
  %v1269 = vpop.f32.mrb[0].mxu0
  %1270 = vmatprep.mubr.f32.mxu0 0.0
  %1271 = vmatmul.mubr.f32.gmra.mrb[0].mxu0 %v1013
  %v1272 = vpop.f32.mrb[0].mxu0
  %v1273 = vadd.f32 %v1006, %v1272
  %v1274 = vpop.f32.mrb[0].mxu0
  %1275 = vmatprep.mubr.f32.mxu0 0.0
  %1276 = vmatmul.mubr.f32.gmra.mrb[0].mxu0 %v1016
  %v1277 = vpop.f32.mrb[0].mxu0
  %v1278 = vadd.f32 %v1006, %v1277
  %v1279 = vpop.f32.mrb[0].mxu0
  %1280 = vmatprep.mubr.f32.mxu0 0.0
  %1281 = vmatmul.mubr.f32.gmra.mrb[0].mxu0 %v1019
  %v1282 = vpop.f32.mrb[0].mxu0
  %v1283 = vadd.f32 %v1006, %v1282
  %v1284 = vpop.f32.mrb[0].mxu0
  %1285 = vmatprep.mubr.f32.mxu0 0.0
  %1286 = vmatmul.mubr.f32.gmra.mrb[0].mxu0 %v1022
  %v1287 = vpop.f32.mrb[0].mxu0
  %v1288 = vadd.f32 %v1006, %v1287
  %v1289 = vpop.f32.mrb[0].mxu0
  %1290 = vmatprep.mubr.f32.mxu0 0.0
  %1291 = vmatmul.mubr.f32.gmra.mrb[0].mxu0 %v1025
  %v1292 = vpop.f32.mrb[0].mxu0
  %v1293 = vadd.f32 %v1006, %v1292
  %v1294 = vpop.f32.mrb[0].mxu0
  %1295 = vmatprep.mubr.f32.mxu0 0.0
  %1296 = vmatmul.mubr.f32.gmra.mrb[0].mxu0 %v1028
  %v1297 = vpop.f32.mrb[0].mxu0
  %v1298 = vadd.f32 %v1006, %v1297
  %v1299 = vpop.f32.mrb[0].mxu0
  %1300 = vmatprep.mubr.f32.mxu0 0.0
  %1301 = vmatmul.mubr.f32.gmra.mrb[0].mxu0 %v1031
  %v1302 = vpop.f32.mrb[0].mxu0
  %v1303 = vadd.f32 %v1006, %v1302
  %v1304 = vpop.f32.mrb[0].mxu0
  %1305 = vmatprep.mubr.f32.mxu0 0.0
  %1306 = vmatmul.mubr.f32.gmra.mrb[0].mxu0 %v1034
  %v1307 = vpop.f32.mrb[0].mxu0
  %v1308 = vadd.f32 %v1006, %v1307
  %v1309 = vpop.f32.mrb[0].mxu0
  %1310 = vmatprep.mubr.f32.mxu0 0.0
  %1311 = vmatmul.mubr.f32.gmra.mrb[0].mxu0 %v1037
  %v1312 = vpop.f32.mrb[0].mxu0
  %v1313 = vadd.f32 %v1006, %v1312
  %v1314 = vpop.f32.mrb[0].mxu0
  %1315 = vmatprep.mubr.f32.mxu0 0.0
  %1316 = vmatmul.mubr.f32.gmra.mrb[0].mxu0 %v1040
  %v1317 = vpop.f32.mrb[0].mxu0
  %v1318 = vadd.f32 %v1006, %v1317
  %v1319 = vpop.f32.mrb[0].mxu0
  %1320 = vmatprep.mubr.f32.mxu0 0.0
  %1321 = vmatmul.mubr.f32.gmra.mrb[0].mxu0 %v1043
  %v1322 = vpop.f32.mrb[0].mxu0
  %v1323 = vadd.f32 %v1006, %v1322
  %v1324 = vpop.f32.mrb[0].mxu0
  %1325 = vmatprep.mubr.f32.mxu0 0.0
  %1326 = vmatmul.mubr.f32.gmra.mrb[0].mxu0 %v1046
  %v1327 = vpop.f32.mrb[0].mxu0
  %v1328 = vadd.f32 %v1006, %v1327
  %v1329 = vpop.f32.mrb[0].mxu0
  %1330 = vmatprep.mubr.f32.mxu0 0.0
  %1331 = vmatmul.mubr.f32.gmra.mrb[0].mxu0 %v1049
  %v1332 = vpop.f32.mrb[0].mxu0
  %v1333 = vadd.f32 %v1006, %v1332
  %v1334 = vpop.f32.mrb[0].mxu0
  %1335 = vmatprep.mubr.f32.mxu0 0.0
  %1336 = vmatmul.mubr.f32.gmra.mrb[0].mxu0 %v1052
  %v1337 = vpop.f32.mrb[0].mxu0
  %v1338 = vadd.f32 %v1006, %v1337
  %v1339 = vpop.f32.mrb[0].mxu0
  %1340 = vmatprep.mubr.f32.mxu0 0.0
  %1341 = vmatmul.mubr.f32.gmra.mrb[0].mxu0 %v1055
  %v1342 = vpop.f32.mrb[0].mxu0
  %v1343 = vadd.f32 %v1006, %v1342
  %v1344 = vpop.f32.mrb[0].mxu0
  %1345 = vmatprep.mubr.f32.mxu0 0.0
  %1346 = vmatmul.mubr.f32.gmra.mrb[0].mxu0 %v1058
  %v1347 = vpop.f32.mrb[0].mxu0
  %v1348 = vadd.f32 %v1006, %v1347
  %v1349 = vpop.f32.mrb[0].mxu0
  %1350 = vmatprep.mubr.f32.mxu0 0.0
  %1351 = vmatmul.mubr.f32.gmra.mrb[0].mxu0 %v1061
  %v1352 = vpop.f32.mrb[0].mxu0
  %v1353 = vadd.f32 %v1006, %v1352
  %v1354 = vpop.f32.mrb[0].mxu0
  %1355 = vmatprep.mubr.f32.mxu0 0.0
  %1356 = vmatmul.mubr.f32.gmra.mrb[0].mxu0 %v1064
  %v1357 = vpop.f32.mrb[0].mxu0
  %v1358 = vadd.f32 %v1006, %v1357
  %v1359 = vpop.f32.mrb[0].mxu0
  %1360 = vmatprep.mubr.f32.mxu0 0.0
  %1361 = vmatmul.mubr.f32.gmra.mrb[0].mxu0 %v1067
  %v1362 = vpop.f32.mrb[0].mxu0
  %v1363 = vadd.f32 %v1006, %v1362
  %v1364 = vpop.f32.mrb[0].mxu0
  %1365 = vmatprep.mubr.f32.mxu0 0.0
  %1366 = vmatmul.mubr.f32.gmra.mrb[0].mxu0 %v1070
  %v1367 = vpop.f32.mrb[0].mxu0
  %v1368 = vadd.f32 %v1006, %v1367
  %v1369 = vpop.f32.mrb[0].mxu0
  %1370 = vmatprep.mubr.f32.mxu0 0.0
  %1371 = vmatmul.mubr.f32.gmra.mrb[0].mxu0 %v1073
  %v1372 = vpop.f32.mrb[0].mxu0
  %v1373 = vadd.f32 %v1006, %v1372
  %v1374 = vpop.f32.mrb[0].mxu0
  %1375 = vmatprep.mubr.f32.mxu0 0.0
  %1376 = vmatmul.mubr.f32.gmra.mrb[0].mxu0 %v1076
  %v1377 = vpop.f32.mrb[0].mxu0
  %v1378 = vadd.f32 %v1006, %v1377
  %v1379 = vpop.f32.mrb[0].mxu0
  %1380 = vmatprep.mubr.f32.mxu0 0.0
  %1381 = vmatmul.mubr.f32.gmra.mrb[0].mxu0 %v1079
  %v1382 = vpop.f32.mrb[0].mxu0
  %v1383 = vadd.f32 %v1006, %v1382
  %v1384 = vpop.f32.mrb[0].mxu0
  %1385 = vmatprep.mubr.f32.mxu0 0.0
  %1386 = vmatmul.mubr.f32.gmra.mrb[0].mxu0 %v1082
  %v1387 = vpop.f32.mrb[0].mxu0
  %v1388 = vadd.f32 %v1006, %v1387
  %v1389 = vpop.f32.mrb[0].mxu0
  %1390 = vmatprep.mubr.f32.mxu0 0.0
  %1391 = vmatmul.mubr.f32.gmra.mrb[0].mxu0 %v1085
  %v1392 = vpop.f32.mrb[0].mxu0
  %v1393 = vadd.f32 %v1006, %v1392
  %v1394 = vpop.f32.mrb[0].mxu0
  %1395 = vmatprep.mubr.f32.mxu0 0.0
  %1396 = vmatmul.mubr.f32.gmra.mrb[0].mxu0 %v1088
  %v1397 = vpop.f32.mrb[0].mxu0
  %v1398 = vadd.f32 %v1006, %v1397
  %v1399 = vpop.f32.mrb[0].mxu0
  %1400 = vmatprep.mubr.f32.mxu0 0.0
  %1401 = vmatmul.mubr.f32.gmra.mrb[0].mxu0 %v1091
  %v1402 = vpop.f32.mrb[0].mxu0
  %v1403 = vadd.f32 %v1006, %v1402
  %v1404 = vpop.f32.mrb[0].mxu0
  %1405 = vmatprep.mubr.f32.mxu0 0.0
  %1406 = vmatmul.mubr.f32.gmra.mrb[0].mxu0 %v1094
  %v1407 = vpop.f32.mrb[0].mxu0
  %v1408 = vadd.f32 %v1006, %v1407
  %v1409 = vpop.f32.mrb[0].mxu0
  %1410 = vmatprep.mubr.f32.mxu0 0.0
  %1411 = vmatmul.mubr.f32.gmra.mrb[0].mxu0 %v1097
  %v1412 = vpop.f32.mrb[0].mxu0
  %v1413 = vadd.f32 %v1006, %v1412
  %v1414 = vpop.f32.mrb[0].mxu0
  %1415 = vmatprep.mubr.f32.mxu0 0.0
  %1416 = vmatmul.mubr.f32.gmra.mrb[0].mxu0 %v1100
  %v1417 = vpop.f32.mrb[0].mxu0
  %v1418 = vadd.f32 %v1006, %v1417
  %v1419 = vpop.f32.mrb[0].mxu0
  %1420 = vmatprep.mubr.f32.mxu0 0.0
  %1421 = vmatmul.mubr.f32.gmra.mrb[0].mxu0 %v1103
  %v1422 = vpop.f32.mrb[0].mxu0
  %v1423 = vadd.f32 %v1006, %v1422
  %v1424 = vpop.f32.mrb[0].mxu0
  %1425 = vmatprep.mubr.f32.mxu0 0.0
  %1426 = vmatmul.mubr.f32.gmra.mrb[0].mxu0 %v1106
  %v1427 = vpop.f32.mrb[0].mxu0
  %v1428 = vadd.f32 %v1006, %v1427
  %v1429 = vpop.f32.mrb[0].mxu0
  %1430 = vmatprep.mubr.f32.mxu0 0.0
  %1431 = vmatmul.mubr.f32.gmra.mrb[0].mxu0 %v1109
  %v1432 = vpop.f32.mrb[0].mxu0
  %v1433 = vadd.f32 %v1006, %v1432
  %v1434 = vpop.f32.mrb[0].mxu0
  %1435 = vmatprep.mubr.f32.mxu0 0.0
  %1436 = vmatmul.mubr.f32.gmra.mrb[0].mxu0 %v1112
  %v1437 = vpop.f32.mrb[0].mxu0
  %v1438 = vadd.f32 %v1006, %v1437
  %v1439 = vpop.f32.mrb[0].mxu0
  %1440 = vmatprep.mubr.f32.mxu0 0.0
  %1441 = vmatmul.mubr.f32.gmra.mrb[0].mxu0 %v1115
  %v1442 = vpop.f32.mrb[0].mxu0
  %v1443 = vadd.f32 %v1006, %v1442
  %v1444 = vpop.f32.mrb[0].mxu0
  %1445 = vmatprep.mubr.f32.mxu0 0.0
  %1446 = vmatmul.mubr.f32.gmra.mrb[0].mxu0 %v1118
  %v1447 = vpop.f32.mrb[0].mxu0
  %v1448 = vadd.f32 %v1006, %v1447
  %v1449 = vpop.f32.mrb[0].mxu0
  %1450 = vmatprep.mubr.f32.mxu0 0.0
  %1451 = vmatmul.mubr.f32.gmra.mrb[0].mxu0 %v1121
  %v1452 = vpop.f32.mrb[0].mxu0
  %v1453 = vadd.f32 %v1006, %v1452
  %v1454 = vpop.f32.mrb[0].mxu0
  %1455 = vmatprep.mubr.f32.mxu0 0.0
  %1456 = vmatmul.mubr.f32.gmra.mrb[0].mxu0 %v1124
  %v1457 = vpop.f32.mrb[0].mxu0
  %v1458 = vadd.f32 %v1006, %v1457
  %v1459 = vpop.f32.mrb[0].mxu0
  %1460 = vmatprep.mubr.f32.mxu0 0.0
  %1461 = vmatmul.mubr.f32.gmra.mrb[0].mxu0 %v1127
  %v1462 = vpop.f32.mrb[0].mxu0
  %v1463 = vadd.f32 %v1006, %v1462
  %v1464 = vpop.f32.mrb[0].mxu0
  %1465 = vmatprep.mubr.f32.mxu0 0.0
  %1466 = vmatmul.mubr.f32.gmra.mrb[0].mxu0 %v1130
  %v1467 = vpop.f32.mrb[0].mxu0
  %v1468 = vadd.f32 %v1006, %v1467
  %v1469 = vpop.f32.mrb[0].mxu0
  %1470 = vmatprep.mubr.f32.mxu0 0.0
  %1471 = vmatmul.mubr.f32.gmra.mrb[0].mxu0 %v1133
  %v1472 = vpop.f32.mrb[0].mxu0
  %v1473 = vadd.f32 %v1006, %v1472
  %v1474 = vpop.f32.mrb[0].mxu0
  %1475 = vmatprep.mubr.f32.mxu0 0.0
  %1476 = vmatmul.mubr.f32.gmra.mrb[0].mxu0 %v1136
  %v1477 = vpop.f32.mrb[0].mxu0
  %v1478 = vadd.f32 %v1006, %v1477
  %v1479 = vpop.f32.mrb[0].mxu0
  %1480 = vmatprep.mubr.f32.mxu0 0.0
  %1481 = vmatmul.mubr.f32.gmra.mrb[0].mxu0 %v1139
  %v1482 = vpop.f32.mrb[0].mxu0
  %v1483 = vadd.f32 %v1006, %v1482
  %v1484 = vpop.f32.mrb[0].mxu0
  %1485 = vmatprep.mubr.f32.mxu0 0.0
  %1486 = vmatmul.mubr.f32.gmra.mrb[0].mxu0 %v1142
  %v1487 = vpop.f32.mrb[0].mxu0
  %v1488 = vadd.f32 %v1006, %v1487
  %v1489 = vpop.f32.mrb[0].mxu0
  %1490 = vmatprep.mubr.f32.mxu0 0.0
  %1491 = vmatmul.mubr.f32.gmra.mrb[0].mxu0 %v1145
  %v1492 = vpop.f32.mrb[0].mxu0
  %v1493 = vadd.f32 %v1006, %v1492
  %v1494 = vpop.f32.mrb[0].mxu0
  %1495 = vmatprep.mubr.f32.mxu0 0.0
  %1496 = vmatmul.mubr.f32.gmra.mrb[0].mxu0 %v1148
  %v1497 = vpop.f32.mrb[0].mxu0
  %v1498 = vadd.f32 %v1006, %v1497
  %v1499 = vpop.f32.mrb[0].mxu0
  %1500 = vmatprep.mubr.f32.mxu0 0.0
  %1501 = vmatmul.mubr.f32.gmra.mrb[0].mxu0 %v1151
  %v1502 = vpop.f32.mrb[0].mxu0
  %v1503 = vadd.f32 %v1006, %v1502
  %v1504 = vpop.f32.mrb[0].mxu0
  %1505 = vmatprep.mubr.f32.mxu0 0.0
  %1506 = vmatmul.mubr.f32.gmra.mrb[0].mxu0 %v1154
  %v1507 = vpop.f32.mrb[0].mxu0
  %v1508 = vadd.f32 %v1006, %v1507
  %v1509 = vpop.f32.mrb[0].mxu0
  %1510 = vmatprep.mubr.f32.mxu0 0.0
  %1511 = vmatmul.mubr.f32.gmra.mrb[0].mxu0 %v1157
  %v1512 = vpop.f32.mrb[0].mxu0
  %v1513 = vadd.f32 %v1006, %v1512
  %v1514 = vpop.f32.mrb[0].mxu0
  %1515 = vmatprep.mubr.f32.mxu0 0.0
  %1516 = vmatmul.mubr.f32.gmra.mrb[0].mxu0 %v1160
  %v1517 = vpop.f32.mrb[0].mxu0
  %v1518 = vadd.f32 %v1006, %v1517
  %v1519 = vpop.f32.mrb[0].mxu0
  %1520 = vmatprep.mubr.f32.mxu0 0.0
  %1521 = vmatmul.mubr.f32.gmra.mrb[0].mxu0 %v1163
  %v1522 = vpop.f32.mrb[0].mxu0
  %v1523 = vadd.f32 %v1006, %v1522
  %v1524 = vpop.f32.mrb[0].mxu0
  %1525 = vmatprep.mubr.f32.mxu0 0.0
  %1526 = vmatmul.mubr.f32.gmra.mrb[0].mxu0 %v1166
  %v1527 = vpop.f32.mrb[0].mxu0
  %v1528 = vadd.f32 %v1006, %v1527
  %v1529 = vpop.f32.mrb[0].mxu0
  %1530 = vmatprep.mubr.f32.mxu0 0.0
  %1531 = vmatmul.mubr.f32.gmra.mrb[0].mxu0 %v1169
  %v1532 = vpop.f32.mrb[0].mxu0
  %v1533 = vadd.f32 %v1006, %v1532
  %v1534 = vpop.f32.mrb[0].mxu0
  %1535 = vmatprep.mubr.f32.mxu0 0.0
  %1536 = vmatmul.mubr.f32.gmra.mrb[0].mxu0 %v1172
  %v1537 = vpop.f32.mrb[0].mxu0
  %v1538 = vadd.f32 %v1006, %v1537
  %v1539 = vpop.f32.mrb[0].mxu0
  %1540 = vmatprep.mubr.f32.mxu0 0.0
  %1541 = vmatmul.mubr.f32.gmra.mrb[0].mxu0 %v1175
  %v1542 = vpop.f32.mrb[0].mxu0
  %v1543 = vadd.f32 %v1006, %v1542
  %v1544 = vpop.f32.mrb[0].mxu0
  %1545 = vmatprep.mubr.f32.mxu0 0.0
  %1546 = vmatmul.mubr.f32.gmra.mrb[0].mxu0 %v1178
  %v1547 = vpop.f32.mrb[0].mxu0
  %v1548 = vadd.f32 %v1006, %v1547
  %v1549 = vpop.f32.mrb[0].mxu0
  %1550 = vmatprep.mubr.f32.mxu0 0.0
  %1551 = vmatmul.mubr.f32.gmra.mrb[0].mxu0 %v1181
  %v1552 = vpop.f32.mrb[0].mxu0
  %v1553 = vadd.f32 %v1006, %v1552
  %v1554 = vpop.f32.mrb[0].mxu0
  %1555 = vmatprep.mubr.f32.mxu0 0.0
  %1556 = vmatmul.mubr.f32.gmra.mrb[0].mxu0 %v1184
  %v1557 = vpop.f32.mrb[0].mxu0
  %v1558 = vadd.f32 %v1006, %v1557
  %v1559 = vpop.f32.mrb[0].mxu0
  %1560 = vmatprep.mubr.f32.mxu0 0.0
  %1561 = vmatmul.mubr.f32.gmra.mrb[0].mxu0 %v1187
  %v1562 = vpop.f32.mrb[0].mxu0
  %v1563 = vadd.f32 %v1006, %v1562
  %v1564 = vpop.f32.mrb[0].mxu0
  %1565 = vmatprep.mubr.f32.mxu0 0.0
  %1566 = vmatmul.mubr.f32.gmra.mrb[0].mxu0 %v1190
  %v1567 = vpop.f32.mrb[0].mxu0
  %v1568 = vadd.f32 %v1006, %v1567
  %v1569 = vpop.f32.mrb[0].mxu0
  %1570 = vmatprep.mubr.f32.mxu0 0.0
  %1571 = vmatmul.mubr.f32.gmra.mrb[0].mxu0 %v1193
  %v1572 = vpop.f32.mrb[0].mxu0
  %v1573 = vadd.f32 %v1006, %v1572
  %v1574 = vpop.f32.mrb[0].mxu0
  %1575 = vmatprep.mubr.f32.mxu0 0.0
  %1576 = vmatmul.mubr.f32.gmra.mrb[0].mxu0 %v1196
  %v1577 = vpop.f32.mrb[0].mxu0
  %v1578 = vadd.f32 %v1006, %v1577
  %v1579 = vpop.f32.mrb[0].mxu0
  %1580 = vmatprep.mubr.f32.mxu0 0.0
  %1581 = vmatmul.mubr.f32.gmra.mrb[0].mxu0 %v1199
  %v1582 = vpop.f32.mrb[0].mxu0
  %v1583 = vadd.f32 %v1006, %v1582
  %v1584 = vpop.f32.mrb[0].mxu0
  %1585 = vdwg.mxu0
  %v1586 = vmul.f32 %v1268, 0.5
  %v1587 = vmul.f32 %v1273, 0.5
  %v1588 = vmul.f32 %v1278, 0.5
  %v1589 = vmul.f32 %v1283, 0.5
  %v1590 = vmul.f32 %v1288, 0.5
  %v1591 = vmul.f32 %v1293, 0.5
  %v1592 = vmul.f32 %v1298, 0.5
  %v1593 = vmul.f32 %v1303, 0.5
  %v1594 = vmul.f32 %v1308, 0.5
  %v1595 = vmul.f32 %v1313, 0.5
  %v1596 = vmul.f32 %v1318, 0.5
  %v1597 = vmul.f32 %v1323, 0.5
  %v1598 = vmul.f32 %v1328, 0.5
  %v1599 = vmul.f32 %v1333, 0.5
  %v1600 = vmul.f32 %v1338, 0.5
  %v1601 = vmul.f32 %v1343, 0.5
  %v1602 = vmul.f32 %v1348, 0.5
  %v1603 = vmul.f32 %v1353, 0.5
  %v1604 = vmul.f32 %v1358, 0.5
  %v1605 = vmul.f32 %v1363, 0.5
  %v1606 = vmul.f32 %v1368, 0.5
  %v1607 = vmul.f32 %v1373, 0.5
  %v1608 = vmul.f32 %v1378, 0.5
  %v1609 = vmul.f32 %v1383, 0.5
  %v1610 = vmul.f32 %v1388, 0.5
  %v1611 = vmul.f32 %v1393, 0.5
  %v1612 = vmul.f32 %v1398, 0.5
  %v1613 = vmul.f32 %v1403, 0.5
  %v1614 = vmul.f32 %v1408, 0.5
  %v1615 = vmul.f32 %v1413, 0.5
  %v1616 = vmul.f32 %v1418, 0.5
  %v1617 = vmul.f32 %v1423, 0.5
  %v1618 = vmul.f32 %v1428, 0.5
  %v1619 = vmul.f32 %v1433, 0.5
  %v1620 = vmul.f32 %v1438, 0.5
  %v1621 = vmul.f32 %v1443, 0.5
  %v1622 = vmul.f32 %v1448, 0.5
  %v1623 = vmul.f32 %v1453, 0.5
  %v1624 = vmul.f32 %v1458, 0.5
  %v1625 = vmul.f32 %v1463, 0.5
  %v1626 = vmul.f32 %v1468, 0.5
  %v1627 = vmul.f32 %v1473, 0.5
  %v1628 = vmul.f32 %v1478, 0.5
  %v1629 = vmul.f32 %v1483, 0.5
  %v1630 = vmul.f32 %v1488, 0.5
  %v1631 = vmul.f32 %v1493, 0.5
  %v1632 = vmul.f32 %v1498, 0.5
  %v1633 = vmul.f32 %v1503, 0.5
  %v1634 = vmul.f32 %v1508, 0.5
  %v1635 = vmul.f32 %v1513, 0.5
  %v1636 = vmul.f32 %v1518, 0.5
  %v1637 = vmul.f32 %v1523, 0.5
  %v1638 = vmul.f32 %v1528, 0.5
  %v1639 = vmul.f32 %v1533, 0.5
  %v1640 = vmul.f32 %v1538, 0.5
  %v1641 = vmul.f32 %v1543, 0.5
  %v1642 = vmul.f32 %v1548, 0.5
  %v1643 = vmul.f32 %v1553, 0.5
  %v1644 = vmul.f32 %v1558, 0.5
  %v1645 = vmul.f32 %v1563, 0.5
  %v1646 = vmul.f32 %v1568, 0.5
  %v1647 = vmul.f32 %v1573, 0.5
  %v1648 = vmul.f32 %v1578, 0.5
  %v1649 = vmul.f32 %v1583, 0.5
  %v1650 = vmul.f32 %v1268, 0.70710677
  %v1651 = vmul.f32 %v1273, 0.70710677
  %v1652 = vmul.f32 %v1278, 0.70710677
  %v1653 = vmul.f32 %v1283, 0.70710677
  %v1654 = vmul.f32 %v1288, 0.70710677
  %v1655 = vmul.f32 %v1293, 0.70710677
  %v1656 = vmul.f32 %v1298, 0.70710677
  %v1657 = vmul.f32 %v1303, 0.70710677
  %v1658 = vmul.f32 %v1308, 0.70710677
  %v1659 = vmul.f32 %v1313, 0.70710677
  %v1660 = vmul.f32 %v1318, 0.70710677
  %v1661 = vmul.f32 %v1323, 0.70710677
  %v1662 = vmul.f32 %v1328, 0.70710677
  %v1663 = vmul.f32 %v1333, 0.70710677
  %v1664 = vmul.f32 %v1338, 0.70710677
  %v1665 = vmul.f32 %v1343, 0.70710677
  %v1666 = vmul.f32 %v1348, 0.70710677
  %v1667 = vmul.f32 %v1353, 0.70710677
  %v1668 = vmul.f32 %v1358, 0.70710677
  %v1669 = vmul.f32 %v1363, 0.70710677
  %v1670 = vmul.f32 %v1368, 0.70710677
  %v1671 = vmul.f32 %v1373, 0.70710677
  %v1672 = vmul.f32 %v1378, 0.70710677
  %v1673 = vmul.f32 %v1383, 0.70710677
  %v1674 = vmul.f32 %v1388, 0.70710677
  %v1675 = vmul.f32 %v1393, 0.70710677
  %v1676 = vmul.f32 %v1398, 0.70710677
  %v1677 = vmul.f32 %v1403, 0.70710677
  %v1678 = vmul.f32 %v1408, 0.70710677
  %v1679 = vmul.f32 %v1413, 0.70710677
  %v1680 = vmul.f32 %v1418, 0.70710677
  %v1681 = vmul.f32 %v1423, 0.70710677
  %v1682 = vmul.f32 %v1428, 0.70710677
  %v1683 = vmul.f32 %v1433, 0.70710677
  %v1684 = vmul.f32 %v1438, 0.70710677
  %v1685 = vmul.f32 %v1443, 0.70710677
  %v1686 = vmul.f32 %v1448, 0.70710677
  %v1687 = vmul.f32 %v1453, 0.70710677
  %v1688 = vmul.f32 %v1458, 0.70710677
  %v1689 = vmul.f32 %v1463, 0.70710677
  %v1690 = vmul.f32 %v1468, 0.70710677
  %v1691 = vmul.f32 %v1473, 0.70710677
  %v1692 = vmul.f32 %v1478, 0.70710677
  %v1693 = vmul.f32 %v1483, 0.70710677
  %v1694 = vmul.f32 %v1488, 0.70710677
  %v1695 = vmul.f32 %v1493, 0.70710677
  %v1696 = vmul.f32 %v1498, 0.70710677
  %v1697 = vmul.f32 %v1503, 0.70710677
  %v1698 = vmul.f32 %v1508, 0.70710677
  %v1699 = vmul.f32 %v1513, 0.70710677
  %v1700 = vmul.f32 %v1518, 0.70710677
  %v1701 = vmul.f32 %v1523, 0.70710677
  %v1702 = vmul.f32 %v1528, 0.70710677
  %v1703 = vmul.f32 %v1533, 0.70710677
  %v1704 = vmul.f32 %v1538, 0.70710677
  %v1705 = vmul.f32 %v1543, 0.70710677
  %v1706 = vmul.f32 %v1548, 0.70710677
  %v1707 = vmul.f32 %v1553, 0.70710677
  %v1708 = vmul.f32 %v1558, 0.70710677
  %v1709 = vmul.f32 %v1563, 0.70710677
  %v1710 = vmul.f32 %v1568, 0.70710677
  %v1711 = vmul.f32 %v1573, 0.70710677
  %v1712 = vmul.f32 %v1578, 0.70710677
  %v1713 = vmul.f32 %v1583, 0.70710677
  %v1714 = verf.f32.pop %v1650
  %v1715 = verf.f32.pop %v1651
  %v1716 = verf.f32.pop %v1652
  %v1717 = verf.f32.pop %v1653
  %v1718 = verf.f32.pop %v1654
  %v1719 = verf.f32.pop %v1655
  %v1720 = verf.f32.pop %v1656
  %v1721 = verf.f32.pop %v1657
  %v1722 = verf.f32.pop %v1658
  %v1723 = verf.f32.pop %v1659
  %v1724 = verf.f32.pop %v1660
  %v1725 = verf.f32.pop %v1661
  %v1726 = verf.f32.pop %v1662
  %v1727 = verf.f32.pop %v1663
  %v1728 = verf.f32.pop %v1664
  %v1729 = verf.f32.pop %v1665
  %v1730 = verf.f32.pop %v1666
  %v1731 = verf.f32.pop %v1667
  %v1732 = verf.f32.pop %v1668
  %v1733 = verf.f32.pop %v1669
  %v1734 = verf.f32.pop %v1670
  %v1735 = verf.f32.pop %v1671
  %v1736 = verf.f32.pop %v1672
  %v1737 = verf.f32.pop %v1673
  %v1738 = verf.f32.pop %v1674
  %v1739 = verf.f32.pop %v1675
  %v1740 = verf.f32.pop %v1676
  %v1741 = verf.f32.pop %v1677
  %v1742 = verf.f32.pop %v1678
  %v1743 = verf.f32.pop %v1679
  %v1744 = verf.f32.pop %v1680
  %v1745 = verf.f32.pop %v1681
  %v1746 = verf.f32.pop %v1682
  %v1747 = verf.f32.pop %v1683
  %v1748 = verf.f32.pop %v1684
  %v1749 = verf.f32.pop %v1685
  %v1750 = verf.f32.pop %v1686
  %v1751 = verf.f32.pop %v1687
  %v1752 = verf.f32.pop %v1688
  %v1753 = verf.f32.pop %v1689
  %v1754 = verf.f32.pop %v1690
  %v1755 = verf.f32.pop %v1691
  %v1756 = verf.f32.pop %v1692
  %v1757 = verf.f32.pop %v1693
  %v1758 = verf.f32.pop %v1694
  %v1759 = verf.f32.pop %v1695
  %v1760 = verf.f32.pop %v1696
  %v1761 = verf.f32.pop %v1697
  %v1762 = verf.f32.pop %v1698
  %v1763 = verf.f32.pop %v1699
  %v1764 = verf.f32.pop %v1700
  %v1765 = verf.f32.pop %v1701
  %v1766 = verf.f32.pop %v1702
  %v1767 = verf.f32.pop %v1703
  %v1768 = verf.f32.pop %v1704
  %v1769 = verf.f32.pop %v1705
  %v1770 = verf.f32.pop %v1706
  %v1771 = verf.f32.pop %v1707
  %v1772 = verf.f32.pop %v1708
  %v1773 = verf.f32.pop %v1709
  %v1774 = verf.f32.pop %v1710
  %v1775 = verf.f32.pop %v1711
  %v1776 = verf.f32.pop %v1712
  %v1777 = verf.f32.pop %v1713
  %v1778 = vadd.f32 %v1714, 1.0
  %v1779 = vadd.f32 %v1715, 1.0
  %v1780 = vadd.f32 %v1716, 1.0
  %v1781 = vadd.f32 %v1717, 1.0
  %v1782 = vadd.f32 %v1718, 1.0
  %v1783 = vadd.f32 %v1719, 1.0
  %v1784 = vadd.f32 %v1720, 1.0
  %v1785 = vadd.f32 %v1721, 1.0
  %v1786 = vadd.f32 %v1722, 1.0
  %v1787 = vadd.f32 %v1723, 1.0
  %v1788 = vadd.f32 %v1724, 1.0
  %v1789 = vadd.f32 %v1725, 1.0
  %v1790 = vadd.f32 %v1726, 1.0
  %v1791 = vadd.f32 %v1727, 1.0
  %v1792 = vadd.f32 %v1728, 1.0
  %v1793 = vadd.f32 %v1729, 1.0
  %v1794 = vadd.f32 %v1730, 1.0
  %v1795 = vadd.f32 %v1731, 1.0
  %v1796 = vadd.f32 %v1732, 1.0
  %v1797 = vadd.f32 %v1733, 1.0
  %v1798 = vadd.f32 %v1734, 1.0
  %v1799 = vadd.f32 %v1735, 1.0
  %v1800 = vadd.f32 %v1736, 1.0
  %v1801 = vadd.f32 %v1737, 1.0
  %v1802 = vadd.f32 %v1738, 1.0
  %v1803 = vadd.f32 %v1739, 1.0
  %v1804 = vadd.f32 %v1740, 1.0
  %v1805 = vadd.f32 %v1741, 1.0
  %v1806 = vadd.f32 %v1742, 1.0
  %v1807 = vadd.f32 %v1743, 1.0
  %v1808 = vadd.f32 %v1744, 1.0
  %v1809 = vadd.f32 %v1745, 1.0
  %v1810 = vadd.f32 %v1746, 1.0
  %v1811 = vadd.f32 %v1747, 1.0
  %v1812 = vadd.f32 %v1748, 1.0
  %v1813 = vadd.f32 %v1749, 1.0
  %v1814 = vadd.f32 %v1750, 1.0
  %v1815 = vadd.f32 %v1751, 1.0
  %v1816 = vadd.f32 %v1752, 1.0
  %v1817 = vadd.f32 %v1753, 1.0
  %v1818 = vadd.f32 %v1754, 1.0
  %v1819 = vadd.f32 %v1755, 1.0
  %v1820 = vadd.f32 %v1756, 1.0
  %v1821 = vadd.f32 %v1757, 1.0
  %v1822 = vadd.f32 %v1758, 1.0
  %v1823 = vadd.f32 %v1759, 1.0
  %v1824 = vadd.f32 %v1760, 1.0
  %v1825 = vadd.f32 %v1761, 1.0
  %v1826 = vadd.f32 %v1762, 1.0
  %v1827 = vadd.f32 %v1763, 1.0
  %v1828 = vadd.f32 %v1764, 1.0
  %v1829 = vadd.f32 %v1765, 1.0
  %v1830 = vadd.f32 %v1766, 1.0
  %v1831 = vadd.f32 %v1767, 1.0
  %v1832 = vadd.f32 %v1768, 1.0
  %v1833 = vadd.f32 %v1769, 1.0
  %v1834 = vadd.f32 %v1770, 1.0
  %v1835 = vadd.f32 %v1771, 1.0
  %v1836 = vadd.f32 %v1772, 1.0
  %v1837 = vadd.f32 %v1773, 1.0
  %v1838 = vadd.f32 %v1774, 1.0
  %v1839 = vadd.f32 %v1775, 1.0
  %v1840 = vadd.f32 %v1776, 1.0
  %v1841 = vadd.f32 %v1777, 1.0
  %v1842 = vmul.f32 %v1586, %v1778
  %v1843 = vmul.f32 %v1587, %v1779
  %v1844 = vmul.f32 %v1588, %v1780
  %v1845 = vmul.f32 %v1589, %v1781
  %v1846 = vmul.f32 %v1590, %v1782
  %v1847 = vmul.f32 %v1591, %v1783
  %v1848 = vmul.f32 %v1592, %v1784
  %v1849 = vmul.f32 %v1593, %v1785
  %v1850 = vmul.f32 %v1594, %v1786
  %v1851 = vmul.f32 %v1595, %v1787
  %v1852 = vmul.f32 %v1596, %v1788
  %v1853 = vmul.f32 %v1597, %v1789
  %v1854 = vmul.f32 %v1598, %v1790
  %v1855 = vmul.f32 %v1599, %v1791
  %v1856 = vmul.f32 %v1600, %v1792
  %v1857 = vmul.f32 %v1601, %v1793
  %v1858 = vmul.f32 %v1602, %v1794
  %v1859 = vmul.f32 %v1603, %v1795
  %v1860 = vmul.f32 %v1604, %v1796
  %v1861 = vmul.f32 %v1605, %v1797
  %v1862 = vmul.f32 %v1606, %v1798
  %v1863 = vmul.f32 %v1607, %v1799
  %v1864 = vmul.f32 %v1608, %v1800
  %v1865 = vmul.f32 %v1609, %v1801
  %v1866 = vmul.f32 %v1610, %v1802
  %v1867 = vmul.f32 %v1611, %v1803
  %v1868 = vmul.f32 %v1612, %v1804
  %v1869 = vmul.f32 %v1613, %v1805
  %v1870 = vmul.f32 %v1614, %v1806
  %v1871 = vmul.f32 %v1615, %v1807
  %v1872 = vmul.f32 %v1616, %v1808
  %v1873 = vmul.f32 %v1617, %v1809
  %v1874 = vmul.f32 %v1618, %v1810
  %v1875 = vmul.f32 %v1619, %v1811
  %v1876 = vmul.f32 %v1620, %v1812
  %v1877 = vmul.f32 %v1621, %v1813
  %v1878 = vmul.f32 %v1622, %v1814
  %v1879 = vmul.f32 %v1623, %v1815
  %v1880 = vmul.f32 %v1624, %v1816
  %v1881 = vmul.f32 %v1625, %v1817
  %v1882 = vmul.f32 %v1626, %v1818
  %v1883 = vmul.f32 %v1627, %v1819
  %v1884 = vmul.f32 %v1628, %v1820
  %v1885 = vmul.f32 %v1629, %v1821
  %v1886 = vmul.f32 %v1630, %v1822
  %v1887 = vmul.f32 %v1631, %v1823
  %v1888 = vmul.f32 %v1632, %v1824
  %v1889 = vmul.f32 %v1633, %v1825
  %v1890 = vmul.f32 %v1634, %v1826
  %v1891 = vmul.f32 %v1635, %v1827
  %v1892 = vmul.f32 %v1636, %v1828
  %v1893 = vmul.f32 %v1637, %v1829
  %v1894 = vmul.f32 %v1638, %v1830
  %v1895 = vmul.f32 %v1639, %v1831
  %v1896 = vmul.f32 %v1640, %v1832
  %v1897 = vmul.f32 %v1641, %v1833
  %v1898 = vmul.f32 %v1642, %v1834
  %v1899 = vmul.f32 %v1643, %v1835
  %v1900 = vmul.f32 %v1644, %v1836
  %v1901 = vmul.f32 %v1645, %v1837
  %v1902 = vmul.f32 %v1646, %v1838
  %v1903 = vmul.f32 %v1647, %v1839
  %v1904 = vmul.f32 %v1648, %v1840
  %v1905 = vmul.f32 %v1649, %v1841
  %1906 = vst [vmem:[%s5] sm:$0xff] %v1842
  %1907 = vst [vmem:[%s5 + $0x8] sm:$0xff] %v1843
  %1908 = vst [vmem:[%s5 + $0x10] sm:$0xff] %v1844
  %1909 = vst [vmem:[%s5 + $0x18] sm:$0xff] %v1845
  %1910 = vst [vmem:[%s5 + $0x20] sm:$0xff] %v1846
  %1911 = vst [vmem:[%s5 + $0x28] sm:$0xff] %v1847
  %1912 = vst [vmem:[%s5 + $0x30] sm:$0xff] %v1848
  %1913 = vst [vmem:[%s5 + $0x38] sm:$0xff] %v1849
  %1914 = vst [vmem:[%s5 + $0x40] sm:$0xff] %v1850
  %1915 = vst [vmem:[%s5 + $0x48] sm:$0xff] %v1851
  %1916 = vst [vmem:[%s5 + $0x50] sm:$0xff] %v1852
  %1917 = vst [vmem:[%s5 + $0x58] sm:$0xff] %v1853
  %1918 = vst [vmem:[%s5 + $0x60] sm:$0xff] %v1854
  %1919 = vst [vmem:[%s5 + $0x68] sm:$0xff] %v1855
  %1920 = vst [vmem:[%s5 + $0x70] sm:$0xff] %v1856
  %1921 = vst [vmem:[%s5 + $0x78] sm:$0xff] %v1857
  %1922 = vst [vmem:[%s5 + $0x80] sm:$0xff] %v1858
  %1923 = vst [vmem:[%s5 + $0x88] sm:$0xff] %v1859
  %1924 = vst [vmem:[%s5 + $0x90] sm:$0xff] %v1860
  %1925 = vst [vmem:[%s5 + $0x98] sm:$0xff] %v1861
  %1926 = vst [vmem:[%s5 + $0xa0] sm:$0xff] %v1862
  %1927 = vst [vmem:[%s5 + $0xa8] sm:$0xff] %v1863
  %1928 = vst [vmem:[%s5 + $0xb0] sm:$0xff] %v1864
  %1929 = vst [vmem:[%s5 + $0xb8] sm:$0xff] %v1865
  %1930 = vst [vmem:[%s5 + $0xc0] sm:$0xff] %v1866
  %1931 = vst [vmem:[%s5 + $0xc8] sm:$0xff] %v1867
  %1932 = vst [vmem:[%s5 + $0xd0] sm:$0xff] %v1868
  %1933 = vst [vmem:[%s5 + $0xd8] sm:$0xff] %v1869
  %1934 = vst [vmem:[%s5 + $0xe0] sm:$0xff] %v1870
  %1935 = vst [vmem:[%s5 + $0xe8] sm:$0xff] %v1871
  %1936 = vst [vmem:[%s5 + $0xf0] sm:$0xff] %v1872
  %1937 = vst [vmem:[%s5 + $0xf8] sm:$0xff] %v1873
  %1938 = vst [vmem:[%s5 + $0x100] sm:$0xff] %v1874
  %1939 = vst [vmem:[%s5 + $0x108] sm:$0xff] %v1875
  %1940 = vst [vmem:[%s5 + $0x110] sm:$0xff] %v1876
  %1941 = vst [vmem:[%s5 + $0x118] sm:$0xff] %v1877
  %1942 = vst [vmem:[%s5 + $0x120] sm:$0xff] %v1878
  %1943 = vst [vmem:[%s5 + $0x128] sm:$0xff] %v1879
  %1944 = vst [vmem:[%s5 + $0x130] sm:$0xff] %v1880
  %1945 = vst [vmem:[%s5 + $0x138] sm:$0xff] %v1881
  %1946 = vst [vmem:[%s5 + $0x140] sm:$0xff] %v1882
  %1947 = vst [vmem:[%s5 + $0x148] sm:$0xff] %v1883
  %1948 = vst [vmem:[%s5 + $0x150] sm:$0xff] %v1884
  %1949 = vst [vmem:[%s5 + $0x158] sm:$0xff] %v1885
  %1950 = vst [vmem:[%s5 + $0x160] sm:$0xff] %v1886
  %1951 = vst [vmem:[%s5 + $0x168] sm:$0xff] %v1887
  %1952 = vst [vmem:[%s5 + $0x170] sm:$0xff] %v1888
  %1953 = vst [vmem:[%s5 + $0x178] sm:$0xff] %v1889
  %1954 = vst [vmem:[%s5 + $0x180] sm:$0xff] %v1890
  %1955 = vst [vmem:[%s5 + $0x188] sm:$0xff] %v1891
  %1956 = vst [vmem:[%s5 + $0x190] sm:$0xff] %v1892
  %1957 = vst [vmem:[%s5 + $0x198] sm:$0xff] %v1893
  %1958 = vst [vmem:[%s5 + $0x1a0] sm:$0xff] %v1894
  %1959 = vst [vmem:[%s5 + $0x1a8] sm:$0xff] %v1895
  %1960 = vst [vmem:[%s5 + $0x1b0] sm:$0xff] %v1896
  %1961 = vst [vmem:[%s5 + $0x1b8] sm:$0xff] %v1897
  %1962 = vst [vmem:[%s5 + $0x1c0] sm:$0xff] %v1898
  %1963 = vst [vmem:[%s5 + $0x1c8] sm:$0xff] %v1899
  %1964 = vst [vmem:[%s5 + $0x1d0] sm:$0xff] %v1900
  %1965 = vst [vmem:[%s5 + $0x1d8] sm:$0xff] %v1901
  %1966 = vst [vmem:[%s5 + $0x1e0] sm:$0xff] %v1902
  %1967 = vst [vmem:[%s5 + $0x1e8] sm:$0xff] %v1903
  %1968 = vst [vmem:[%s5 + $0x1f0] sm:$0xff] %v1904
  %1969 = vst [vmem:[%s5 + $0x1f8] sm:$0xff] %v1905
  // Predicated region
  $region22: #{two_stage_linear.1} parent=0 // pred_check
    _
  $region23: #{two_stage_linear.1} parent=0 // pred_check_branch
    %1971 = sbr.rel (0) target = $region25
  $region24: #{two_stage_linear.1} parent=0 // pred_region
    _
  $region25: #{two_stage_linear.1} parent=0 // pred_fallthru
    _
  // Predicated region
  $region26: #{two_stage_linear.1} parent=0 // pred_check
    _
  $region27: #{two_stage_linear.1} parent=0 // pred_check_branch
    %1973 = sbr.rel (0) target = $region29
  $region28: #{two_stage_linear.1} parent=0 // pred_region
    _
  $region29: #{two_stage_linear.1} parent=0 // pred_fallthru
    _

</llo_original>
